<compile_context>
chip_gen: v7x
topology: tpu7x:2x2x1
jax: 0.10.0
libtpu: 0.0.40
codegen_flags: <defaults>
</compile_context>

<pallas_src>
import jax
import jax.numpy as jnp
from jax.experimental import pallas as pl
from jax.experimental.pallas import tpu as pltpu

# ---- problem sizes (small, consistent with the module) ----
S, B, E, H, F = 8, 2, 32, 4, 64      # seq, batch, d_model, nhead, dim_feedforward
DH = E // H                          # head dim
N = S * B                            # flattened token count, row n = s*B + b
EPS = 1e-5                           # layer_norm_eps
SCALE = 1.0 / (DH ** 0.5)
NEG = -1e30


def _layer_norm(y, gamma, beta):
    mu = jnp.mean(y, axis=-1, keepdims=True)
    var = jnp.mean((y - mu) ** 2, axis=-1, keepdims=True)   # biased var, like torch
    return (y - mu) * jax.lax.rsqrt(var + EPS) * gamma + beta


def encoder_layer_kernel(x_ref, wqkv_ref, woh_ref, w1_ref, w2_ref, vecs_ref, o_ref):
    x = x_ref[...].astype(jnp.float32)                       # (N, E), row n = (s, b)

    # ---- packed small vectors (static slices of one ref) ----
    b_qkv = vecs_ref[0:1, :]                                 # (1, 3E)
    b1    = vecs_ref[1:2, :F]                                # (1, F)
    b_o   = vecs_ref[2:3, :E]
    g1    = vecs_ref[3:4, :E]
    be1   = vecs_ref[4:5, :E]
    b2    = vecs_ref[5:6, :E]
    g2    = vecs_ref[6:7, :E]
    be2   = vecs_ref[7:8, :E]

    # ---- fused QKV projection: single MXU matmul ----
    qkv = jnp.dot(x, wqkv_ref[...],
                  preferred_element_type=jnp.float32) + b_qkv        # (N, 3E)

    def split_heads(off):
        # lane block [off, off+E) of qkv -> (H, N, DH), heads on a leading axis
        return jnp.stack(
            [qkv[:, off + h * DH: off + (h + 1) * DH] for h in range(H)], axis=0)

    qh = split_heads(0) * SCALE                              # (H, N, DH)
    kh = split_heads(E)
    vh = split_heads(2 * E)

    # block-diagonal additive bias keeps attention within each batch element
    r = jax.lax.broadcasted_iota(jnp.int32, (N, N), 0)
    c = jax.lax.broadcasted_iota(jnp.int32, (N, N), 1)
    bias = jnp.where((r % B) == (c % B), 0.0, NEG).astype(jnp.float32)   # (N, N)

    scores = jnp.einsum('hnd,hmd->hnm', qh, kh,
                        preferred_element_type=jnp.float32) + bias[None]  # (H,N,N)
    s_max = jnp.max(scores, axis=-1, keepdims=True)
    p = jnp.exp(scores - s_max)
    denom = jnp.sum(p, axis=-1, keepdims=True)
    p = p * pl.reciprocal(denom, approx=True)                # softmax (EUP recip)

    ctx = jnp.einsum('hnm,hmd->hnd', p, vh,
                     preferred_element_type=jnp.float32)     # (H, N, DH)

    # per-head folded output projection; reduce over head axis (no concat)
    attn = jnp.einsum('hnd,hde->hne', ctx, woh_ref[...],
                      preferred_element_type=jnp.float32)    # (H, N, E)
    attn = jnp.sum(attn, axis=0) + b_o                       # (N, E)

    # dropout1 is identity (eval mode)
    y = _layer_norm(x + attn, g1, be1)                       # norm1

    # ---- feed-forward: linear2(relu(linear1(y))) ----
    hdn = jnp.dot(y, w1_ref[...], preferred_element_type=jnp.float32) + b1
    hdn = jnp.maximum(hdn, 0.0)                              # relu
    ff = jnp.dot(hdn, w2_ref[...], preferred_element_type=jnp.float32) + b2

    # dropout / dropout2 are identity (eval mode)
    o_ref[...] = _layer_norm(y + ff, g2, be2).astype(o_ref.dtype)   # norm2


def transformer_encoder_layer(src, kernel_params):
    """src: (S, B, E) float32 (seq, batch, d_model).  Returns (S, B, E)."""
    x2d = src.reshape(N, E)              # row-major reshape: free, no transpose
    vmem = pltpu.MemorySpace.VMEM
    out2d = pl.pallas_call(
        encoder_layer_kernel,
        out_shape=jax.ShapeDtypeStruct((N, E), src.dtype),
        in_specs=[pl.BlockSpec(memory_space=vmem)] * 6,
        out_specs=pl.BlockSpec(memory_space=vmem),
    )(x2d, *kernel_params)
    return out2d.reshape(S, B, E)        # free reshape back


def init_raw_params(key):
    """Torch-layout parameters of the encoder layer."""
    ks = jax.random.split(key, 8)
    scale = 0.05
    return dict(
        in_proj_w=scale * jax.random.normal(ks[0], (3 * E, E), jnp.float32),
        in_proj_b=scale * jax.random.normal(ks[1], (3 * E,), jnp.float32),
        out_w=scale * jax.random.normal(ks[2], (E, E), jnp.float32),
        out_b=scale * jax.random.normal(ks[3], (E,), jnp.float32),
        w1=scale * jax.random.normal(ks[4], (F, E), jnp.float32),
        b1=scale * jax.random.normal(ks[5], (F,), jnp.float32),
        w2=scale * jax.random.normal(ks[6], (E, F), jnp.float32),
        b2=scale * jax.random.normal(ks[7], (E,), jnp.float32),
        g1=jnp.ones((E,), jnp.float32), be1=jnp.zeros((E,), jnp.float32),
        g2=jnp.ones((E,), jnp.float32), be2=jnp.zeros((E,), jnp.float32),
    )


def pack_kernel_params(raw):
    """Pack torch-layout params into the 5 kernel weight operands."""
    wqkv = raw['in_proj_w'].T                      # (E, 3E):  x @ W_in^T
    woh = raw['out_w'].T.reshape(H, DH, E)         # per-head output projection
    w1t = raw['w1'].T                              # (E, F)
    w2t = raw['w2'].T                              # (F, E)

    def row(v):                                    # pad every vector to width 3E
        return jnp.pad(v, (0, 3 * E - v.shape[0]))[None, :]

    vecs = jnp.concatenate([
        row(raw['in_proj_b']),   # 0: fused qkv bias (3E)
        row(raw['b1']),          # 1: linear1 bias (F)
        row(raw['out_b']),       # 2
        row(raw['g1']),          # 3
        row(raw['be1']),         # 4
        row(raw['b2']),          # 5
        row(raw['g2']),          # 6
        row(raw['be2']),         # 7
    ], axis=0)                                     # (8, 3E)
    return [wqkv, woh, w1t, w2t, vecs]


def reference(src, raw):
    """Pure-JAX reference mirroring the PyTorch forward (post-norm, eval mode)."""
    wq, wk, wv = jnp.split(raw['in_proj_w'], 3, axis=0)
    bq, bk, bv = jnp.split(raw['in_proj_b'], 3)

    def one_batch(x):                                        # x: (S, E)
        q = ((x @ wq.T + bq).reshape(S, H, DH)).transpose(1, 0, 2) * SCALE
        k = ((x @ wk.T + bk).reshape(S, H, DH)).transpose(1, 0, 2)
        v = ((x @ wv.T + bv).reshape(S, H, DH)).transpose(1, 0, 2)
        s = jnp.einsum('hsd,htd->hst', q, k)
        p = jax.nn.softmax(s, axis=-1)
        ctx = jnp.einsum('hst,htd->hsd', p, v).transpose(1, 0, 2).reshape(S, E)
        attn = ctx @ raw['out_w'].T + raw['out_b']
        y = _layer_norm(x + attn, raw['g1'], raw['be1'])
        ff = jnp.maximum(y @ raw['w1'].T + raw['b1'], 0.0) @ raw['w2'].T + raw['b2']
        return _layer_norm(y + ff, raw['g2'], raw['be2'])

    xb = jnp.transpose(src, (1, 0, 2))                       # (B, S, E)
    return jnp.transpose(jax.vmap(one_batch)(xb), (1, 0, 2))


if __name__ == "__main__":
    key = jax.random.PRNGKey(0)
    k_src, k_par = jax.random.split(key)
    src = jax.random.normal(k_src, (S, B, E), jnp.float32)   # (seq, batch, d_model)
    raw = init_raw_params(k_par)
    kparams = pack_kernel_params(raw)

    out = transformer_encoder_layer(src, kparams)
    out = jax.block_until_ready(out)

    ref = reference(src, raw)
    assert out.shape == (S, B, E)
    # tolerance accounts for the EUP approximate reciprocal in the softmax
    assert jnp.allclose(out, ref, rtol=5e-3, atol=5e-3), "mismatch vs. JAX reference"

    # TODO(synk): training-mode dropout (p=0.1) is stochastic in PyTorch; eval-mode
    # (identity) semantics are implemented, and only the src_mask=None path.
    print("KERNEL_OK")
</pallas_src>

<mosaic_0001>
module attributes {stable_mosaic.version = 11 : i64} {
  func.func @encoder_layer_kernel(%arg0: memref<16x32xf32, #tpu.memory_space<vmem>>, %arg1: memref<32x96xf32, #tpu.memory_space<vmem>>, %arg2: memref<4x8x32xf32, #tpu.memory_space<vmem>>, %arg3: memref<32x64xf32, #tpu.memory_space<vmem>>, %arg4: memref<64x32xf32, #tpu.memory_space<vmem>>, %arg5: memref<8x96xf32, #tpu.memory_space<vmem>>, %arg6: memref<16x32xf32, #tpu.memory_space<vmem>>) attributes {dimension_semantics = [], scalar_prefetch = 0 : i64, scratch_operands = 0 : i64, tpu.core_type = #tpu.core_type<tc>} {
    %c0 = arith.constant 0 : index
    %c0_0 = arith.constant 0 : index
    %0 = vector.load %arg0[%c0, %c0_0] : memref<16x32xf32, #tpu.memory_space<vmem>>, vector<16x32xf32>
    %c0_1 = arith.constant 0 : index
    %c0_2 = arith.constant 0 : index
    %1 = vector.load %arg5[%c0_1, %c0_2] : memref<8x96xf32, #tpu.memory_space<vmem>>, vector<1x96xf32>
    %c1 = arith.constant 1 : index
    %c0_3 = arith.constant 0 : index
    %2 = vector.load %arg5[%c1, %c0_3] : memref<8x96xf32, #tpu.memory_space<vmem>>, vector<1x64xf32>
    %c2 = arith.constant 2 : index
    %c0_4 = arith.constant 0 : index
    %3 = vector.load %arg5[%c2, %c0_4] : memref<8x96xf32, #tpu.memory_space<vmem>>, vector<1x32xf32>
    %c3 = arith.constant 3 : index
    %c0_5 = arith.constant 0 : index
    %4 = vector.load %arg5[%c3, %c0_5] : memref<8x96xf32, #tpu.memory_space<vmem>>, vector<1x32xf32>
    %c4 = arith.constant 4 : index
    %c0_6 = arith.constant 0 : index
    %5 = vector.load %arg5[%c4, %c0_6] : memref<8x96xf32, #tpu.memory_space<vmem>>, vector<1x32xf32>
    %c5 = arith.constant 5 : index
    %c0_7 = arith.constant 0 : index
    %6 = vector.load %arg5[%c5, %c0_7] : memref<8x96xf32, #tpu.memory_space<vmem>>, vector<1x32xf32>
    %c6 = arith.constant 6 : index
    %c0_8 = arith.constant 0 : index
    %7 = vector.load %arg5[%c6, %c0_8] : memref<8x96xf32, #tpu.memory_space<vmem>>, vector<1x32xf32>
    %c7 = arith.constant 7 : index
    %c0_9 = arith.constant 0 : index
    %8 = vector.load %arg5[%c7, %c0_9] : memref<8x96xf32, #tpu.memory_space<vmem>>, vector<1x32xf32>
    %c0_10 = arith.constant 0 : index
    %c0_11 = arith.constant 0 : index
    %9 = vector.load %arg1[%c0_10, %c0_11] : memref<32x96xf32, #tpu.memory_space<vmem>>, vector<32x96xf32>
    %cst = arith.constant dense<0.000000e+00> : vector<16x96xf32>
    %10 = tpu.matmul %0, %9, %cst {dimension_numbers = #tpu.dot_dimension_numbers<[1], [0], [0], [1], [0, 0, 1, 1], [], []>} : vector<16x32xf32>, vector<32x96xf32>, vector<16x96xf32> -> vector<16x96xf32>
    %11 = vector.broadcast %1 : vector<1x96xf32> to vector<16x96xf32>
    %12 = arith.addf %10, %11 : vector<16x96xf32>
    %13 = vector.extract_strided_slice %12 {offsets = [0, 0], sizes = [16, 8], strides = [1, 1]} : vector<16x96xf32> to vector<16x8xf32>
    %14 = vector.extract_strided_slice %12 {offsets = [0, 8], sizes = [16, 8], strides = [1, 1]} : vector<16x96xf32> to vector<16x8xf32>
    %15 = vector.extract_strided_slice %12 {offsets = [0, 16], sizes = [16, 8], strides = [1, 1]} : vector<16x96xf32> to vector<16x8xf32>
    %16 = vector.extract_strided_slice %12 {offsets = [0, 24], sizes = [16, 8], strides = [1, 1]} : vector<16x96xf32> to vector<16x8xf32>
    %17 = vector.shape_cast %13 : vector<16x8xf32> to vector<1x16x8xf32>
    %18 = vector.shape_cast %14 : vector<16x8xf32> to vector<1x16x8xf32>
    %19 = vector.shape_cast %15 : vector<16x8xf32> to vector<1x16x8xf32>
    %20 = vector.shape_cast %16 : vector<16x8xf32> to vector<1x16x8xf32>
    %21 = tpu.concatenate %17, %18, %19, %20 in 0 : vector<1x16x8xf32>, vector<1x16x8xf32>, vector<1x16x8xf32>, vector<1x16x8xf32> -> vector<4x16x8xf32>
    %cst_12 = arith.constant 0.353553385 : f32
    %22 = vector.broadcast %cst_12 : f32 to vector<4x16x8xf32>
    %23 = arith.mulf %21, %22 : vector<4x16x8xf32>
    %24 = vector.extract_strided_slice %12 {offsets = [0, 32], sizes = [16, 8], strides = [1, 1]} : vector<16x96xf32> to vector<16x8xf32>
    %25 = vector.extract_strided_slice %12 {offsets = [0, 40], sizes = [16, 8], strides = [1, 1]} : vector<16x96xf32> to vector<16x8xf32>
    %26 = vector.extract_strided_slice %12 {offsets = [0, 48], sizes = [16, 8], strides = [1, 1]} : vector<16x96xf32> to vector<16x8xf32>
    %27 = vector.extract_strided_slice %12 {offsets = [0, 56], sizes = [16, 8], strides = [1, 1]} : vector<16x96xf32> to vector<16x8xf32>
    %28 = vector.shape_cast %24 : vector<16x8xf32> to vector<1x16x8xf32>
    %29 = vector.shape_cast %25 : vector<16x8xf32> to vector<1x16x8xf32>
    %30 = vector.shape_cast %26 : vector<16x8xf32> to vector<1x16x8xf32>
    %31 = vector.shape_cast %27 : vector<16x8xf32> to vector<1x16x8xf32>
    %32 = tpu.concatenate %28, %29, %30, %31 in 0 : vector<1x16x8xf32>, vector<1x16x8xf32>, vector<1x16x8xf32>, vector<1x16x8xf32> -> vector<4x16x8xf32>
    %33 = vector.extract_strided_slice %12 {offsets = [0, 64], sizes = [16, 8], strides = [1, 1]} : vector<16x96xf32> to vector<16x8xf32>
    %34 = vector.extract_strided_slice %12 {offsets = [0, 72], sizes = [16, 8], strides = [1, 1]} : vector<16x96xf32> to vector<16x8xf32>
    %35 = vector.extract_strided_slice %12 {offsets = [0, 80], sizes = [16, 8], strides = [1, 1]} : vector<16x96xf32> to vector<16x8xf32>
    %36 = vector.extract_strided_slice %12 {offsets = [0, 88], sizes = [16, 8], strides = [1, 1]} : vector<16x96xf32> to vector<16x8xf32>
    %37 = vector.shape_cast %33 : vector<16x8xf32> to vector<1x16x8xf32>
    %38 = vector.shape_cast %34 : vector<16x8xf32> to vector<1x16x8xf32>
    %39 = vector.shape_cast %35 : vector<16x8xf32> to vector<1x16x8xf32>
    %40 = vector.shape_cast %36 : vector<16x8xf32> to vector<1x16x8xf32>
    %41 = tpu.concatenate %37, %38, %39, %40 in 0 : vector<1x16x8xf32>, vector<1x16x8xf32>, vector<1x16x8xf32>, vector<1x16x8xf32> -> vector<4x16x8xf32>
    %42 = tpu.iota {dimensions = array<i32: 0>} : vector<16x16xi32>
    %43 = tpu.iota {dimensions = array<i32: 1>} : vector<16x16xi32>
    %c2_i32 = arith.constant 2 : i32
    %c0_i32 = arith.constant 0 : i32
    %44 = arith.cmpi eq, %c2_i32, %c0_i32 : i32
    %c1_i32 = arith.constant 1 : i32
    %45 = arith.select %44, %c1_i32, %c2_i32 : i32
    %46 = vector.broadcast %45 : i32 to vector<16x16xi32>
    %47 = arith.remsi %42, %46 : vector<16x16xi32>
    %c0_i32_13 = arith.constant 0 : i32
    %48 = vector.broadcast %c0_i32_13 : i32 to vector<16x16xi32>
    %49 = arith.cmpi ne, %47, %48 : vector<16x16xi32>
    %c0_i32_14 = arith.constant 0 : i32
    %50 = vector.broadcast %c0_i32_14 : i32 to vector<16x16xi32>
    %51 = arith.cmpi slt, %47, %50 : vector<16x16xi32>
    %c0_i32_15 = arith.constant 0 : i32
    %52 = arith.cmpi slt, %45, %c0_i32_15 : i32
    %53 = vector.broadcast %52 : i1 to vector<16x16xi1>
    %54 = vector.broadcast %53 : vector<16x16xi1> to vector<16x16xi1>
    %55 = arith.xori %51, %54 : vector<16x16xi1>
    %56 = arith.andi %55, %49 : vector<16x16xi1>
    %57 = vector.broadcast %45 : i32 to vector<16x16xi32>
    %58 = arith.addi %47, %57 : vector<16x16xi32>
    %59 = arith.select %56, %58, %47 : vector<16x16xi1>, vector<16x16xi32>
    %c2_i32_16 = arith.constant 2 : i32
    %c0_i32_17 = arith.constant 0 : i32
    %60 = arith.cmpi eq, %c2_i32_16, %c0_i32_17 : i32
    %c1_i32_18 = arith.constant 1 : i32
    %61 = arith.select %60, %c1_i32_18, %c2_i32_16 : i32
    %62 = vector.broadcast %61 : i32 to vector<16x16xi32>
    %63 = arith.remsi %43, %62 : vector<16x16xi32>
    %c0_i32_19 = arith.constant 0 : i32
    %64 = vector.broadcast %c0_i32_19 : i32 to vector<16x16xi32>
    %65 = arith.cmpi ne, %63, %64 : vector<16x16xi32>
    %c0_i32_20 = arith.constant 0 : i32
    %66 = vector.broadcast %c0_i32_20 : i32 to vector<16x16xi32>
    %67 = arith.cmpi slt, %63, %66 : vector<16x16xi32>
    %c0_i32_21 = arith.constant 0 : i32
    %68 = arith.cmpi slt, %61, %c0_i32_21 : i32
    %69 = vector.broadcast %68 : i1 to vector<16x16xi1>
    %70 = vector.broadcast %69 : vector<16x16xi1> to vector<16x16xi1>
    %71 = arith.xori %67, %70 : vector<16x16xi1>
    %72 = arith.andi %71, %65 : vector<16x16xi1>
    %73 = vector.broadcast %61 : i32 to vector<16x16xi32>
    %74 = arith.addi %63, %73 : vector<16x16xi32>
    %75 = arith.select %72, %74, %63 : vector<16x16xi1>, vector<16x16xi32>
    %76 = arith.cmpi eq, %59, %75 : vector<16x16xi32>
    %cst_22 = arith.constant 0.000000e+00 : f32
    %cst_23 = arith.constant -1.000000e+30 : f32
    %77 = vector.broadcast %cst_22 : f32 to vector<16x16xf32>
    %78 = vector.broadcast %cst_23 : f32 to vector<16x16xf32>
    %79 = arith.select %76, %77, %78 : vector<16x16xi1>, vector<16x16xf32>
    "tpu.trace_start"() <{level = 10 : i32, message = "hnd,hmd->hnm"}> : () -> ()
    %cst_24 = arith.constant dense<0.000000e+00> : vector<4x16x16xf32>
    %80 = tpu.matmul %23, %32, %cst_24 {dimension_numbers = #tpu.dot_dimension_numbers<[2], [2], [1], [1], [0, 0, 0, 1, 1, 1], [0], [0]>} : vector<4x16x8xf32>, vector<4x16x8xf32>, vector<4x16x16xf32> -> vector<4x16x16xf32>
    "tpu.trace_stop"() : () -> ()
    %81 = vector.shape_cast %79 : vector<16x16xf32> to vector<1x16x16xf32>
    %82 = vector.broadcast %81 : vector<1x16x16xf32> to vector<4x16x16xf32>
    %83 = arith.addf %80, %82 : vector<4x16x16xf32>
    %cst_25 = arith.constant dense<0xFF800000> : vector<4x16xf32>
    %84 = vector.multi_reduction <maximumf>, %83, %cst_25 [2] : vector<4x16x16xf32> to vector<4x16xf32>
    %85 = vector.shape_cast %84 : vector<4x16xf32> to vector<4x16x1xf32>
    %86 = vector.broadcast %85 : vector<4x16x1xf32> to vector<4x16x16xf32>
    %87 = arith.subf %83, %86 : vector<4x16x16xf32>
    %88 = math.exp %87 : vector<4x16x16xf32>
    %cst_26 = arith.constant dense<0.000000e+00> : vector<4x16xf32>
    %89 = vector.multi_reduction <add>, %88, %cst_26 [2] : vector<4x16x16xf32> to vector<4x16xf32>
    %90 = vector.shape_cast %89 : vector<4x16xf32> to vector<4x16x1xf32>
    %91 = tpu.reciprocal %90 {approx = true} : vector<4x16x1xf32> -> vector<4x16x1xf32>
    %92 = vector.broadcast %91 : vector<4x16x1xf32> to vector<4x16x16xf32>
    %93 = arith.mulf %88, %92 : vector<4x16x16xf32>
    "tpu.trace_start"() <{level = 10 : i32, message = "hnm,hmd->hnd"}> : () -> ()
    %cst_27 = arith.constant dense<0.000000e+00> : vector<4x16x8xf32>
    %94 = tpu.matmul %93, %41, %cst_27 {dimension_numbers = #tpu.dot_dimension_numbers<[2], [1], [1], [2], [0, 0, 0, 1, 1, 2], [0], [0]>} : vector<4x16x16xf32>, vector<4x16x8xf32>, vector<4x16x8xf32> -> vector<4x16x8xf32>
    "tpu.trace_stop"() : () -> ()
    %c0_28 = arith.constant 0 : index
    %c0_29 = arith.constant 0 : index
    %c0_30 = arith.constant 0 : index
    %95 = vector.load %arg2[%c0_28, %c0_29, %c0_30] : memref<4x8x32xf32, #tpu.memory_space<vmem>>, vector<4x8x32xf32>
    "tpu.trace_start"() <{level = 10 : i32, message = "hnd,hde->hne"}> : () -> ()
    %cst_31 = arith.constant dense<0.000000e+00> : vector<4x16x32xf32>
    %96 = tpu.matmul %94, %95, %cst_31 {dimension_numbers = #tpu.dot_dimension_numbers<[2], [1], [1], [2], [0, 0, 0, 1, 1, 2], [0], [0]>} : vector<4x16x8xf32>, vector<4x8x32xf32>, vector<4x16x32xf32> -> vector<4x16x32xf32>
    "tpu.trace_stop"() : () -> ()
    %cst_32 = arith.constant dense<0.000000e+00> : vector<16x32xf32>
    %97 = vector.multi_reduction <add>, %96, %cst_32 [0] : vector<4x16x32xf32> to vector<16x32xf32>
    %98 = vector.broadcast %3 : vector<1x32xf32> to vector<16x32xf32>
    %99 = arith.addf %97, %98 : vector<16x32xf32>
    %100 = arith.addf %0, %99 : vector<16x32xf32>
    %cst_33 = arith.constant dense<0.000000e+00> : vector<16xf32>
    %101 = vector.multi_reduction <add>, %100, %cst_33 [1] : vector<16x32xf32> to vector<16xf32>
    %102 = vector.shape_cast %101 : vector<16xf32> to vector<16x1xf32>
    %cst_34 = arith.constant 3.200000e+01 : f32
    %103 = vector.broadcast %cst_34 : f32 to vector<16x1xf32>
    %104 = arith.divf %102, %103 : vector<16x1xf32>
    %105 = vector.broadcast %104 : vector<16x1xf32> to vector<16x32xf32>
    %106 = arith.subf %100, %105 : vector<16x32xf32>
    %107 = arith.mulf %106, %106 : vector<16x32xf32>
    %cst_35 = arith.constant dense<0.000000e+00> : vector<16xf32>
    %108 = vector.multi_reduction <add>, %107, %cst_35 [1] : vector<16x32xf32> to vector<16xf32>
    %109 = vector.shape_cast %108 : vector<16xf32> to vector<16x1xf32>
    %cst_36 = arith.constant 3.200000e+01 : f32
    %110 = vector.broadcast %cst_36 : f32 to vector<16x1xf32>
    %111 = arith.divf %109, %110 : vector<16x1xf32>
    %112 = vector.broadcast %104 : vector<16x1xf32> to vector<16x32xf32>
    %113 = arith.subf %100, %112 : vector<16x32xf32>
    %cst_37 = arith.constant 9.99999974E-6 : f32
    %114 = vector.broadcast %cst_37 : f32 to vector<16x1xf32>
    %115 = arith.addf %111, %114 : vector<16x1xf32>
    %116 = math.rsqrt %115 : vector<16x1xf32>
    %117 = vector.broadcast %116 : vector<16x1xf32> to vector<16x32xf32>
    %118 = arith.mulf %113, %117 : vector<16x32xf32>
    %119 = vector.broadcast %4 : vector<1x32xf32> to vector<16x32xf32>
    %120 = arith.mulf %118, %119 : vector<16x32xf32>
    %121 = vector.broadcast %5 : vector<1x32xf32> to vector<16x32xf32>
    %122 = arith.addf %120, %121 : vector<16x32xf32>
    %c0_38 = arith.constant 0 : index
    %c0_39 = arith.constant 0 : index
    %123 = vector.load %arg3[%c0_38, %c0_39] : memref<32x64xf32, #tpu.memory_space<vmem>>, vector<32x64xf32>
    %cst_40 = arith.constant dense<0.000000e+00> : vector<16x64xf32>
    %124 = tpu.matmul %122, %123, %cst_40 {dimension_numbers = #tpu.dot_dimension_numbers<[1], [0], [0], [1], [0, 0, 1, 1], [], []>} : vector<16x32xf32>, vector<32x64xf32>, vector<16x64xf32> -> vector<16x64xf32>
    %125 = vector.broadcast %2 : vector<1x64xf32> to vector<16x64xf32>
    %126 = arith.addf %124, %125 : vector<16x64xf32>
    %cst_41 = arith.constant 0.000000e+00 : f32
    %127 = vector.broadcast %cst_41 : f32 to vector<16x64xf32>
    %128 = arith.maximumf %126, %127 : vector<16x64xf32>
    %c0_42 = arith.constant 0 : index
    %c0_43 = arith.constant 0 : index
    %129 = vector.load %arg4[%c0_42, %c0_43] : memref<64x32xf32, #tpu.memory_space<vmem>>, vector<64x32xf32>
    %cst_44 = arith.constant dense<0.000000e+00> : vector<16x32xf32>
    %130 = tpu.matmul %128, %129, %cst_44 {dimension_numbers = #tpu.dot_dimension_numbers<[1], [0], [0], [1], [0, 0, 1, 1], [], []>} : vector<16x64xf32>, vector<64x32xf32>, vector<16x32xf32> -> vector<16x32xf32>
    %131 = vector.broadcast %6 : vector<1x32xf32> to vector<16x32xf32>
    %132 = arith.addf %130, %131 : vector<16x32xf32>
    %133 = arith.addf %122, %132 : vector<16x32xf32>
    %cst_45 = arith.constant dense<0.000000e+00> : vector<16xf32>
    %134 = vector.multi_reduction <add>, %133, %cst_45 [1] : vector<16x32xf32> to vector<16xf32>
    %135 = vector.shape_cast %134 : vector<16xf32> to vector<16x1xf32>
    %cst_46 = arith.constant 3.200000e+01 : f32
    %136 = vector.broadcast %cst_46 : f32 to vector<16x1xf32>
    %137 = arith.divf %135, %136 : vector<16x1xf32>
    %138 = vector.broadcast %137 : vector<16x1xf32> to vector<16x32xf32>
    %139 = arith.subf %133, %138 : vector<16x32xf32>
    %140 = arith.mulf %139, %139 : vector<16x32xf32>
    %cst_47 = arith.constant dense<0.000000e+00> : vector<16xf32>
    %141 = vector.multi_reduction <add>, %140, %cst_47 [1] : vector<16x32xf32> to vector<16xf32>
    %142 = vector.shape_cast %141 : vector<16xf32> to vector<16x1xf32>
    %cst_48 = arith.constant 3.200000e+01 : f32
    %143 = vector.broadcast %cst_48 : f32 to vector<16x1xf32>
    %144 = arith.divf %142, %143 : vector<16x1xf32>
    %145 = vector.broadcast %137 : vector<16x1xf32> to vector<16x32xf32>
    %146 = arith.subf %133, %145 : vector<16x32xf32>
    %cst_49 = arith.constant 9.99999974E-6 : f32
    %147 = vector.broadcast %cst_49 : f32 to vector<16x1xf32>
    %148 = arith.addf %144, %147 : vector<16x1xf32>
    %149 = math.rsqrt %148 : vector<16x1xf32>
    %150 = vector.broadcast %149 : vector<16x1xf32> to vector<16x32xf32>
    %151 = arith.mulf %146, %150 : vector<16x32xf32>
    %152 = vector.broadcast %7 : vector<1x32xf32> to vector<16x32xf32>
    %153 = arith.mulf %151, %152 : vector<16x32xf32>
    %154 = vector.broadcast %8 : vector<1x32xf32> to vector<16x32xf32>
    %155 = arith.addf %153, %154 : vector<16x32xf32>
    %c0_50 = arith.constant 0 : index
    %c0_51 = arith.constant 0 : index
    %156 = vector.load %arg6[%c0_50, %c0_51] : memref<16x32xf32, #tpu.memory_space<vmem>>, vector<16x32xf32>
    tpu.vector_store %arg6[%c0_50, %c0_51], %155 {strides = array<i32>} : memref<16x32xf32, #tpu.memory_space<vmem>>, vector<16x32xf32>,
    return
  }
}

</mosaic_0001>

<llo_original>
// kernel: tpu_custom_call.1
$region0: #{tpu_custom_call.1}
  #allocation0 [shape = 'u32[]', space=smem, size = 0x4, offset = 0x4, fixed_abs, tag = 'smem constant byte address 0x4 - core index']
  #allocation1 [shape = 'u32[144,128]{1,0:T(1,128)}', space=vmem, size = 0x12000, scoped, tag = 'internal scratch']
  %s0 = inlined_call_operand.hbm [shape: f32[16,32], index: 0, kind: input, shape index: {}]
  %s1 = inlined_call_operand.vmem [shape: f32[32,96], index: 1, kind: input, shape index: {}]
  %s2 = inlined_call_operand.vmem [shape: f32[4,8,32], index: 2, kind: input, shape index: {}]
  %s3 = inlined_call_operand.vmem [shape: f32[32,64], index: 3, kind: input, shape index: {}]
  %s4 = inlined_call_operand.vmem [shape: f32[64,32], index: 4, kind: input, shape index: {}]
  %s5 = inlined_call_operand.vmem [shape: f32[8,96], index: 5, kind: input, shape index: {}]
  %s6 = inlined_call_operand.hbm [shape: f32[16,32], index: 6, kind: output, shape index: {}]
  %s7 = sld [smem:[#allocation0]]
  $region38: #{tpu_custom_call.1} parent=0
    _
  %s9 = ssub.s32 1, %s7
  %s10 = scalar_select 0, %s9, %s7
  $region1: #{tpu_custom_call.1} parent=0
    #allocation2 [shape = 'u8[8192]{0}', space=vmem, size = 0x2000, scoped, tag = 'input window, operand 0, single buffered']
    #allocation3 [shape = 's32[1]{0}', space=sflag, size = 0x4, scoped, tag = 'scoped memory for tpu_custom_call.1']
    #allocation4 [shape = 's32[1]{0}', space=sflag, size = 0x4, scoped, tag = 'scoped memory for tpu_custom_call.1']
    #allocation5 [shape = 'u8[8192]{0}', space=vmem, size = 0x2000, scoped, tag = 'output window, operand 0, single buffered']
    %11 = vsyncpa [#allocation3], 0
    %12 = vsyncpa [#allocation4], 0
    // Predicated region
    $region2: #{tpu_custom_call.1} parent=1 // pred_check
      _
    $region3: #{tpu_custom_call.1} parent=1 // pred_check_branch
      %14 = sbr.rel (0) target = $region5
    $region4: #{tpu_custom_call.1} parent=1 // pred_region
      %s16 = ssub.s32 256, 256
      %17 = vsyncadd [#allocation3], %s16
      %s18 = sshll.u32 [#allocation2], 4
      %s19 = int_to_ptr.vmem [resolvable:$true] %s18
      %24 = dma.hbm_to_vmem [thread:$0]  %s0, 256, %s19, [#allocation3], 128, 128, 8
    $region5: #{tpu_custom_call.1} parent=1 // pred_fallthru
      _
    // Predicated region
    $region6: #{tpu_custom_call.1} parent=1 // pred_check
      _
    $region7: #{tpu_custom_call.1} parent=1 // pred_check_branch
      %26 = sbr.rel (0) target = $region9
    $region8: #{tpu_custom_call.1} parent=1 // pred_region
      _
    $region9: #{tpu_custom_call.1} parent=1 // pred_fallthru
      _
    // Predicated region
    $region10: #{tpu_custom_call.1} parent=1 // pred_check
      _
    $region11: #{tpu_custom_call.1} parent=1 // pred_check_branch
      %28 = sbr.rel (0) target = $region13
    $region12: #{tpu_custom_call.1} parent=1 // pred_region
      _
    $region13: #{tpu_custom_call.1} parent=1 // pred_fallthru
      _
    // Predicated region
    $region14: #{tpu_custom_call.1} parent=1 // pred_check
      _
    $region15: #{tpu_custom_call.1} parent=1 // pred_check_branch
      %30 = sbr.rel (0) target = $region17
    $region16: #{tpu_custom_call.1} parent=1 // pred_region
      _
    $region17: #{tpu_custom_call.1} parent=1 // pred_fallthru
      _
    // Predicated region
    $region18: #{tpu_custom_call.1} parent=1 // pred_check
      _
    $region19: #{tpu_custom_call.1} parent=1 // pred_check_branch
      %32 = sbr.rel (0) target = $region21
    $region20: #{tpu_custom_call.1} parent=1 // pred_region
      _
    $region21: #{tpu_custom_call.1} parent=1 // pred_fallthru
      _
    // Predicated region
    $region22: #{tpu_custom_call.1} parent=1 // pred_check
      _
    $region23: #{tpu_custom_call.1} parent=1 // pred_check_branch
      %34 = sbr.rel (0) target = $region25
    $region24: #{tpu_custom_call.1} parent=1 // pred_region
      _
    $region25: #{tpu_custom_call.1} parent=1 // pred_fallthru
      _
    // Predicated region
    $region26: #{tpu_custom_call.1} parent=1 // pred_check
      _
    $region27: #{tpu_custom_call.1} parent=1 // pred_check_branch
      %36 = sbr.rel (0) target = $region29
    $region28: #{tpu_custom_call.1} parent=1 // pred_region
      %37 = dma.done [#allocation3], 256
    $region29: #{tpu_custom_call.1} parent=1 // pred_fallthru
      _
    %v38 = vld [vmem:[#allocation2] sm:$0xff]
    %v39 = vld [vmem:[#allocation2 + $0x8] sm:$0xff]
    %v40 = vld [vmem:[%s5] sm:$0x1]
    %v41 = vld [vmem:[%s5 + $0x1] sm:$0x1]
    %v42 = vld [vmem:[%s5 + $0x2] sm:$0x1]
    %v43 = vld [vmem:[%s5 + $0x3] sm:$0x1]
    %v44 = vld [vmem:[%s5 + $0x4] sm:$0x1]
    %v45 = vld [vmem:[%s5 + $0x5] sm:$0x1]
    %v46 = vld [vmem:[%s5 + $0x6] sm:$0x1]
    %v47 = vld [vmem:[%s5 + $0x7] sm:$0x1]
    %v48 = vld [vmem:[%s1] sm:$0xff]
    %v49 = vld [vmem:[%s1 + $0x8] sm:$0xff]
    %v50 = vld [vmem:[%s1 + $0x10] sm:$0xff]
    %v51 = vld [vmem:[%s1 + $0x18] sm:$0xff]
    %v52 = vlaneseq
    %v53 = vshrl.u32 %v52, 7
    %v54 = vsub.s32 0, %v53
    %v55 = vrot.slane %v40, %v54
    %vm56 = vcmask 261120
    %v58 = vsel %vm56, %v38, 0
    %v61 = vsel %vm56, %v39, 0
    %63 = vmatprep.subr.mxu0 0.0
    %64 = vmatpush1.msra.mxu0 %v48
    %65 = vmatprep.subr.mxu0 0.0
    %66 = vmatpush1.msra.mxu0 %v49
    %67 = vmatprep.subr.mxu0 0.0
    %68 = vmatpush1.msra.mxu0 %v50
    %69 = vmatprep.subr.mxu0 0.0
    %70 = vmatpush1.msra.mxu0 %v51
    %71 = vmatprep.subr.mxu0 0.0
    %72 = vmatpush1.msra.mxu0 0.0
    %73 = vmatprep.subr.mxu0 0.0
    %74 = vmatpush1.msra.mxu0 0.0
    %75 = vmatprep.subr.mxu0 0.0
    %76 = vmatpush1.msra.mxu0 0.0
    %77 = vmatprep.subr.mxu0 0.0
    %78 = vmatpush1.msra.mxu0 0.0
    %79 = vmatprep.subr.mxu0 0.0
    %80 = vmatpush1.msra.mxu0 0.0
    %81 = vmatprep.subr.mxu0 0.0
    %82 = vmatpush1.msra.mxu0 0.0
    %83 = vmatprep.subr.mxu0 0.0
    %84 = vmatpush1.msra.mxu0 0.0
    %85 = vmatprep.subr.mxu0 0.0
    %86 = vmatpush1.msra.mxu0 0.0
    %87 = vmatprep.subr.mxu0 0.0
    %88 = vmatpush1.msra.mxu0 0.0
    %89 = vmatprep.subr.mxu0 0.0
    %90 = vmatpush1.msra.mxu0 0.0
    %91 = vmatprep.subr.mxu0 0.0
    %92 = vmatpush1.msra.mxu0 0.0
    %93 = vmatprep.subr.mxu0 0.0
    %94 = vmatpush1.msra.mxu0 0.0
    %95 = vmatprep.subr.mxu0 0.0
    %96 = vmatpush1.msra.mxu0 0.0
    %97 = vmatprep.subr.mxu0 0.0
    %98 = vmatpush1.msra.mxu0 0.0
    %99 = vmatprep.subr.mxu0 0.0
    %100 = vmatpush1.msra.mxu0 0.0
    %101 = vmatprep.subr.mxu0 0.0
    %102 = vmatpush1.msra.mxu0 0.0
    %103 = vmatprep.subr.mxu0 0.0
    %104 = vmatpush1.msra.mxu0 0.0
    %105 = vmatprep.subr.mxu0 0.0
    %106 = vmatpush1.msra.mxu0 0.0
    %107 = vmatprep.subr.mxu0 0.0
    %108 = vmatpush1.msra.mxu0 0.0
    %109 = vmatprep.subr.mxu0 0.0
    %110 = vmatpush1.msra.mxu0 0.0
    %111 = vmatprep.subr.mxu0 0.0
    %112 = vmatpush1.msra.mxu0 0.0
    %113 = vmatprep.subr.mxu0 0.0
    %114 = vmatpush1.msra.mxu0 0.0
    %115 = vmatprep.subr.mxu0 0.0
    %116 = vmatpush1.msra.mxu0 0.0
    %117 = vmatprep.subr.mxu0 0.0
    %118 = vmatpush1.msra.mxu0 0.0
    %119 = vmatprep.subr.mxu0 0.0
    %120 = vmatpush1.msra.mxu0 0.0
    %121 = vmatprep.subr.mxu0 0.0
    %122 = vmatpush1.msra.mxu0 0.0
    %123 = vmatprep.subr.mxu0 0.0
    %124 = vmatpush1.msra.mxu0 0.0
    %125 = vmatprep.subr.mxu0 0.0
    %126 = vmatpush1.msra.mxu0 0.0
    %127 = vmatprep.mubr.f32.mxu0 0.0
    %128 = vmatmul.mubr.f32.gmra.mrb[0].mxu0 %v58
    %v129 = vpop.f32.mrb[0].mxu0
    %v130 = vadd.f32 %v55, %v129
    %v131 = vpop.f32.mrb[0].mxu0
    %132 = vmatprep.mubr.f32.mxu0 0.0
    %133 = vmatmul.mubr.f32.gmra.mrb[0].mxu0 %v61
    %v134 = vpop.f32.mrb[0].mxu0
    %v135 = vadd.f32 %v55, %v134
    %v136 = vpop.f32.mrb[0].mxu0
    %137 = vdwg.mxu0
    %140 = vrot.lane.b32.xlu0 %v130, 120
    %v141 = vpop.permute.xlu0 %140
    %142 = vrot.lane.b32.xlu0 %v135, 120
    %v143 = vpop.permute.xlu0 %142
    %146 = vrot.lane.b32.xlu0 %v130, 112
    %v147 = vpop.permute.xlu0 %146
    %148 = vrot.lane.b32.xlu0 %v135, 112
    %v149 = vpop.permute.xlu0 %148
    %152 = vrot.lane.b32.xlu0 %v130, 104
    %v153 = vpop.permute.xlu0 %152
    %154 = vrot.lane.b32.xlu0 %v135, 104
    %v155 = vpop.permute.xlu0 %154
    %v158 = vmul.f32 %v130, 0.35355338
    %v159 = vmul.f32 %v135, 0.35355338
    %v160 = vmul.f32 %v141, 0.35355338
    %v161 = vmul.f32 %v143, 0.35355338
    %v162 = vmul.f32 %v147, 0.35355338
    %v163 = vmul.f32 %v149, 0.35355338
    %v164 = vmul.f32 %v153, 0.35355338
    %v165 = vmul.f32 %v155, 0.35355338
    %v166 = vlaneseq
    %v167 = vshrl.u32 %v166, 7
    %v168 = vadd.s32 %v167, 8
    %v169 = vlaneseq
    %v170 = vand.u32 %v169, 127
    %vm171 = vcmp.lt.s32.totalorder %v167, 0
    %v172 = vsub.s32 0, %v167
    %v173 = vsel %vm171, %v172, %v167
    %v174 = vshrl.u32 %v173, 1
    %v175 = vand.u32 %v173, 1
    %v176 = vsub.s32 0, %v175
    %v177 = vsel %vm171, %v176, %v175
    %vm178 = vcmp.lt.s32.totalorder %v168, 0
    %v179 = vsub.s32 0, %v168
    %v180 = vsel %vm178, %v179, %v168
    %v181 = vshrl.u32 %v180, 1
    %v182 = vand.u32 %v180, 1
    %v183 = vsub.s32 0, %v182
    %v184 = vsel %vm178, %v183, %v182
    %vm185 = vcmp.ne.s32.totalorder %v177, 0
    %vm186 = vcmp.ne.s32.totalorder %v184, 0
    %vm187 = vcmp.lt.s32.totalorder %v177, 0
    %vm188 = vcmp.lt.s32.totalorder %v184, 0
    %vm189 = vmand %vm187, %vm185
    %vm190 = vmand %vm188, %vm186
    %v191 = vadd.s32 %v177, 2
    %v192 = vadd.s32 %v184, 2
    %v193 = vsel %vm189, %v191, %v177
    %v194 = vsel %vm190, %v192, %v184
    %vm195 = vcmp.lt.s32.totalorder %v170, 0
    %v196 = vsub.s32 0, %v170
    %v197 = vsel %vm195, %v196, %v170
    %v198 = vshrl.u32 %v197, 1
    %v199 = vand.u32 %v197, 1
    %v200 = vsub.s32 0, %v199
    %v201 = vsel %vm195, %v200, %v199
    %vm202 = vcmp.ne.s32.totalorder %v201, 0
    %vm203 = vcmp.lt.s32.totalorder %v201, 0
    %vm204 = vmand %vm203, %vm202
    %v205 = vadd.s32 %v201, 2
    %v206 = vsel %vm204, %v205, %v201
    %vm207 = vcmp.eq.s32.totalorder %v193, %v206
    %vm208 = vcmp.eq.s32.totalorder %v194, %v206
    %v209 = vsel %vm207, 0.0, -1e+30
    %v210 = vsel %vm208, 0.0, -1e+30
    %211 = vrot.lane.b32.xlu0 %v130, 96
    %v212 = vpop.permute.xlu0 %211
    %213 = vrot.lane.b32.xlu0 %v135, 96
    %v214 = vpop.permute.xlu0 %213
    %vm215 = vcmask 64512
    %v217 = vsel %vm215, %v158, 0
    %v220 = vsel %vm215, %v159, 0
    %v222 = vsel %vm215, %v212, 0
    %v224 = vsel %vm215, %v214, 0
    %226 = vmatprep.subr.mxu0 0.0
    %227 = vmatpush1.xpose.msra.mxu0 %v222
    %228 = vmatprep.subr.mxu0 0.0
    %229 = vmatpush1.xpose.msra.mxu0 %v224
    %230 = vmatprep.subr.mxu0 0.0
    %231 = vmatpush1.xpose.msra.mxu0 0.0
    %232 = vmatprep.subr.mxu0 0.0
    %233 = vmatpush1.xpose.msra.mxu0 0.0
    %234 = vmatprep.subr.mxu0 0.0
    %235 = vmatpush1.xpose.msra.mxu0 0.0
    %236 = vmatprep.subr.mxu0 0.0
    %237 = vmatpush1.xpose.msra.mxu0 0.0
    %238 = vmatprep.subr.mxu0 0.0
    %239 = vmatpush1.xpose.msra.mxu0 0.0
    %240 = vmatprep.subr.mxu0 0.0
    %241 = vmatpush1.xpose.msra.mxu0 0.0
    %242 = vmatprep.subr.mxu0 0.0
    %243 = vmatpush1.xpose.msra.mxu0 0.0
    %244 = vmatprep.subr.mxu0 0.0
    %245 = vmatpush1.xpose.msra.mxu0 0.0
    %246 = vmatprep.subr.mxu0 0.0
    %247 = vmatpush1.xpose.msra.mxu0 0.0
    %248 = vmatprep.subr.mxu0 0.0
    %249 = vmatpush1.xpose.msra.mxu0 0.0
    %250 = vmatprep.subr.mxu0 0.0
    %251 = vmatpush1.xpose.msra.mxu0 0.0
    %252 = vmatprep.subr.mxu0 0.0
    %253 = vmatpush1.xpose.msra.mxu0 0.0
    %254 = vmatprep.subr.mxu0 0.0
    %255 = vmatpush1.xpose.msra.mxu0 0.0
    %256 = vmatprep.subr.mxu0 0.0
    %257 = vmatpush1.xpose.msra.mxu0 0.0
    %258 = vmatprep.subr.mxu0 0.0
    %259 = vmatpush1.xpose.msra.mxu0 0.0
    %260 = vmatprep.subr.mxu0 0.0
    %261 = vmatpush1.xpose.msra.mxu0 0.0
    %262 = vmatprep.subr.mxu0 0.0
    %263 = vmatpush1.xpose.msra.mxu0 0.0
    %264 = vmatprep.subr.mxu0 0.0
    %265 = vmatpush1.xpose.msra.mxu0 0.0
    %266 = vmatprep.subr.mxu0 0.0
    %267 = vmatpush1.xpose.msra.mxu0 0.0
    %268 = vmatprep.subr.mxu0 0.0
    %269 = vmatpush1.xpose.msra.mxu0 0.0
    %270 = vmatprep.subr.mxu0 0.0
    %271 = vmatpush1.xpose.msra.mxu0 0.0
    %272 = vmatprep.subr.mxu0 0.0
    %273 = vmatpush1.xpose.msra.mxu0 0.0
    %274 = vmatprep.subr.mxu0 0.0
    %275 = vmatpush1.xpose.msra.mxu0 0.0
    %276 = vmatprep.subr.mxu0 0.0
    %277 = vmatpush1.xpose.msra.mxu0 0.0
    %278 = vmatprep.subr.mxu0 0.0
    %279 = vmatpush1.xpose.msra.mxu0 0.0
    %280 = vmatprep.subr.mxu0 0.0
    %281 = vmatpush1.xpose.msra.mxu0 0.0
    %282 = vmatprep.subr.mxu0 0.0
    %283 = vmatpush1.xpose.msra.mxu0 0.0
    %284 = vmatprep.subr.mxu0 0.0
    %285 = vmatpush1.xpose.msra.mxu0 0.0
    %286 = vmatprep.subr.mxu0 0.0
    %287 = vmatpush1.xpose.msra.mxu0 0.0
    %288 = vmatprep.subr.mxu0 0.0
    %289 = vmatpush1.xpose.msra.mxu0 0.0
    %290 = vmatprep.mubr.f32.mxu0 0.0
    %291 = vmatmul.mubr.f32.gmra.mrb[0].mxu0 %v217
    %v292 = vpop.f32.mrb[0].mxu0
    %v293 = vadd.f32 %v209, %v292
    %v294 = vpop.f32.mrb[0].mxu0
    %295 = vmatprep.mubr.f32.mxu0 0.0
    %296 = vmatmul.mubr.f32.gmra.mrb[0].mxu0 %v220
    %v297 = vpop.f32.mrb[0].mxu0
    %v298 = vadd.f32 %v210, %v297
    %v299 = vpop.f32.mrb[0].mxu0
    %300 = vdwg.mxu0
    %301 = vrot.lane.b32.xlu0 %v141, 96
    %v302 = vpop.permute.xlu0 %301
    %303 = vrot.lane.b32.xlu0 %v143, 96
    %v304 = vpop.permute.xlu0 %303
    %v306 = vsel %vm215, %v160, 0
    %v309 = vsel %vm215, %v161, 0
    %v311 = vsel %vm215, %v302, 0
    %v313 = vsel %vm215, %v304, 0
    %315 = vmatprep.subr.mxu0 0.0
    %316 = vmatpush1.xpose.msra.mxu0 %v311
    %317 = vmatprep.subr.mxu0 0.0
    %318 = vmatpush1.xpose.msra.mxu0 %v313
    %319 = vmatprep.subr.mxu0 0.0
    %320 = vmatpush1.xpose.msra.mxu0 0.0
    %321 = vmatprep.subr.mxu0 0.0
    %322 = vmatpush1.xpose.msra.mxu0 0.0
    %323 = vmatprep.subr.mxu0 0.0
    %324 = vmatpush1.xpose.msra.mxu0 0.0
    %325 = vmatprep.subr.mxu0 0.0
    %326 = vmatpush1.xpose.msra.mxu0 0.0
    %327 = vmatprep.subr.mxu0 0.0
    %328 = vmatpush1.xpose.msra.mxu0 0.0
    %329 = vmatprep.subr.mxu0 0.0
    %330 = vmatpush1.xpose.msra.mxu0 0.0
    %331 = vmatprep.subr.mxu0 0.0
    %332 = vmatpush1.xpose.msra.mxu0 0.0
    %333 = vmatprep.subr.mxu0 0.0
    %334 = vmatpush1.xpose.msra.mxu0 0.0
    %335 = vmatprep.subr.mxu0 0.0
    %336 = vmatpush1.xpose.msra.mxu0 0.0
    %337 = vmatprep.subr.mxu0 0.0
    %338 = vmatpush1.xpose.msra.mxu0 0.0
    %339 = vmatprep.subr.mxu0 0.0
    %340 = vmatpush1.xpose.msra.mxu0 0.0
    %341 = vmatprep.subr.mxu0 0.0
    %342 = vmatpush1.xpose.msra.mxu0 0.0
    %343 = vmatprep.subr.mxu0 0.0
    %344 = vmatpush1.xpose.msra.mxu0 0.0
    %345 = vmatprep.subr.mxu0 0.0
    %346 = vmatpush1.xpose.msra.mxu0 0.0
    %347 = vmatprep.subr.mxu0 0.0
    %348 = vmatpush1.xpose.msra.mxu0 0.0
    %349 = vmatprep.subr.mxu0 0.0
    %350 = vmatpush1.xpose.msra.mxu0 0.0
    %351 = vmatprep.subr.mxu0 0.0
    %352 = vmatpush1.xpose.msra.mxu0 0.0
    %353 = vmatprep.subr.mxu0 0.0
    %354 = vmatpush1.xpose.msra.mxu0 0.0
    %355 = vmatprep.subr.mxu0 0.0
    %356 = vmatpush1.xpose.msra.mxu0 0.0
    %357 = vmatprep.subr.mxu0 0.0
    %358 = vmatpush1.xpose.msra.mxu0 0.0
    %359 = vmatprep.subr.mxu0 0.0
    %360 = vmatpush1.xpose.msra.mxu0 0.0
    %361 = vmatprep.subr.mxu0 0.0
    %362 = vmatpush1.xpose.msra.mxu0 0.0
    %363 = vmatprep.subr.mxu0 0.0
    %364 = vmatpush1.xpose.msra.mxu0 0.0
    %365 = vmatprep.subr.mxu0 0.0
    %366 = vmatpush1.xpose.msra.mxu0 0.0
    %367 = vmatprep.subr.mxu0 0.0
    %368 = vmatpush1.xpose.msra.mxu0 0.0
    %369 = vmatprep.subr.mxu0 0.0
    %370 = vmatpush1.xpose.msra.mxu0 0.0
    %371 = vmatprep.subr.mxu0 0.0
    %372 = vmatpush1.xpose.msra.mxu0 0.0
    %373 = vmatprep.subr.mxu0 0.0
    %374 = vmatpush1.xpose.msra.mxu0 0.0
    %375 = vmatprep.subr.mxu0 0.0
    %376 = vmatpush1.xpose.msra.mxu0 0.0
    %377 = vmatprep.subr.mxu0 0.0
    %378 = vmatpush1.xpose.msra.mxu0 0.0
    %379 = vmatprep.mubr.f32.mxu0 0.0
    %380 = vmatmul.mubr.f32.gmra.mrb[0].mxu0 %v306
    %v381 = vpop.f32.mrb[0].mxu0
    %v382 = vadd.f32 %v209, %v381
    %v383 = vpop.f32.mrb[0].mxu0
    %384 = vmatprep.mubr.f32.mxu0 0.0
    %385 = vmatmul.mubr.f32.gmra.mrb[0].mxu0 %v309
    %v386 = vpop.f32.mrb[0].mxu0
    %v387 = vadd.f32 %v210, %v386
    %v388 = vpop.f32.mrb[0].mxu0
    %389 = vdwg.mxu0
    %390 = vrot.lane.b32.xlu0 %v147, 96
    %v391 = vpop.permute.xlu0 %390
    %392 = vrot.lane.b32.xlu0 %v149, 96
    %v393 = vpop.permute.xlu0 %392
    %v395 = vsel %vm215, %v162, 0
    %v398 = vsel %vm215, %v163, 0
    %v400 = vsel %vm215, %v391, 0
    %v402 = vsel %vm215, %v393, 0
    %404 = vmatprep.subr.mxu0 0.0
    %405 = vmatpush1.xpose.msra.mxu0 %v400
    %406 = vmatprep.subr.mxu0 0.0
    %407 = vmatpush1.xpose.msra.mxu0 %v402
    %408 = vmatprep.subr.mxu0 0.0
    %409 = vmatpush1.xpose.msra.mxu0 0.0
    %410 = vmatprep.subr.mxu0 0.0
    %411 = vmatpush1.xpose.msra.mxu0 0.0
    %412 = vmatprep.subr.mxu0 0.0
    %413 = vmatpush1.xpose.msra.mxu0 0.0
    %414 = vmatprep.subr.mxu0 0.0
    %415 = vmatpush1.xpose.msra.mxu0 0.0
    %416 = vmatprep.subr.mxu0 0.0
    %417 = vmatpush1.xpose.msra.mxu0 0.0
    %418 = vmatprep.subr.mxu0 0.0
    %419 = vmatpush1.xpose.msra.mxu0 0.0
    %420 = vmatprep.subr.mxu0 0.0
    %421 = vmatpush1.xpose.msra.mxu0 0.0
    %422 = vmatprep.subr.mxu0 0.0
    %423 = vmatpush1.xpose.msra.mxu0 0.0
    %424 = vmatprep.subr.mxu0 0.0
    %425 = vmatpush1.xpose.msra.mxu0 0.0
    %426 = vmatprep.subr.mxu0 0.0
    %427 = vmatpush1.xpose.msra.mxu0 0.0
    %428 = vmatprep.subr.mxu0 0.0
    %429 = vmatpush1.xpose.msra.mxu0 0.0
    %430 = vmatprep.subr.mxu0 0.0
    %431 = vmatpush1.xpose.msra.mxu0 0.0
    %432 = vmatprep.subr.mxu0 0.0
    %433 = vmatpush1.xpose.msra.mxu0 0.0
    %434 = vmatprep.subr.mxu0 0.0
    %435 = vmatpush1.xpose.msra.mxu0 0.0
    %436 = vmatprep.subr.mxu0 0.0
    %437 = vmatpush1.xpose.msra.mxu0 0.0
    %438 = vmatprep.subr.mxu0 0.0
    %439 = vmatpush1.xpose.msra.mxu0 0.0
    %440 = vmatprep.subr.mxu0 0.0
    %441 = vmatpush1.xpose.msra.mxu0 0.0
    %442 = vmatprep.subr.mxu0 0.0
    %443 = vmatpush1.xpose.msra.mxu0 0.0
    %444 = vmatprep.subr.mxu0 0.0
    %445 = vmatpush1.xpose.msra.mxu0 0.0
    %446 = vmatprep.subr.mxu0 0.0
    %447 = vmatpush1.xpose.msra.mxu0 0.0
    %448 = vmatprep.subr.mxu0 0.0
    %449 = vmatpush1.xpose.msra.mxu0 0.0
    %450 = vmatprep.subr.mxu0 0.0
    %451 = vmatpush1.xpose.msra.mxu0 0.0
    %452 = vmatprep.subr.mxu0 0.0
    %453 = vmatpush1.xpose.msra.mxu0 0.0
    %454 = vmatprep.subr.mxu0 0.0
    %455 = vmatpush1.xpose.msra.mxu0 0.0
    %456 = vmatprep.subr.mxu0 0.0
    %457 = vmatpush1.xpose.msra.mxu0 0.0
    %458 = vmatprep.subr.mxu0 0.0
    %459 = vmatpush1.xpose.msra.mxu0 0.0
    %460 = vmatprep.subr.mxu0 0.0
    %461 = vmatpush1.xpose.msra.mxu0 0.0
    %462 = vmatprep.subr.mxu0 0.0
    %463 = vmatpush1.xpose.msra.mxu0 0.0
    %464 = vmatprep.subr.mxu0 0.0
    %465 = vmatpush1.xpose.msra.mxu0 0.0
    %466 = vmatprep.subr.mxu0 0.0
    %467 = vmatpush1.xpose.msra.mxu0 0.0
    %468 = vmatprep.mubr.f32.mxu0 0.0
    %469 = vmatmul.mubr.f32.gmra.mrb[0].mxu0 %v395
    %v470 = vpop.f32.mrb[0].mxu0
    %v471 = vadd.f32 %v209, %v470
    %v472 = vpop.f32.mrb[0].mxu0
    %473 = vmatprep.mubr.f32.mxu0 0.0
    %474 = vmatmul.mubr.f32.gmra.mrb[0].mxu0 %v398
    %v475 = vpop.f32.mrb[0].mxu0
    %v476 = vadd.f32 %v210, %v475
    %v477 = vpop.f32.mrb[0].mxu0
    %478 = vdwg.mxu0
    %479 = vrot.lane.b32.xlu0 %v153, 96
    %v480 = vpop.permute.xlu0 %479
    %481 = vrot.lane.b32.xlu0 %v155, 96
    %v482 = vpop.permute.xlu0 %481
    %v484 = vsel %vm215, %v164, 0
    %v487 = vsel %vm215, %v165, 0
    %v489 = vsel %vm215, %v480, 0
    %v491 = vsel %vm215, %v482, 0
    %493 = vmatprep.subr.mxu0 0.0
    %494 = vmatpush1.xpose.msra.mxu0 %v489
    %495 = vmatprep.subr.mxu0 0.0
    %496 = vmatpush1.xpose.msra.mxu0 %v491
    %497 = vmatprep.subr.mxu0 0.0
    %498 = vmatpush1.xpose.msra.mxu0 0.0
    %499 = vmatprep.subr.mxu0 0.0
    %500 = vmatpush1.xpose.msra.mxu0 0.0
    %501 = vmatprep.subr.mxu0 0.0
    %502 = vmatpush1.xpose.msra.mxu0 0.0
    %503 = vmatprep.subr.mxu0 0.0
    %504 = vmatpush1.xpose.msra.mxu0 0.0
    %505 = vmatprep.subr.mxu0 0.0
    %506 = vmatpush1.xpose.msra.mxu0 0.0
    %507 = vmatprep.subr.mxu0 0.0
    %508 = vmatpush1.xpose.msra.mxu0 0.0
    %509 = vmatprep.subr.mxu0 0.0
    %510 = vmatpush1.xpose.msra.mxu0 0.0
    %511 = vmatprep.subr.mxu0 0.0
    %512 = vmatpush1.xpose.msra.mxu0 0.0
    %513 = vmatprep.subr.mxu0 0.0
    %514 = vmatpush1.xpose.msra.mxu0 0.0
    %515 = vmatprep.subr.mxu0 0.0
    %516 = vmatpush1.xpose.msra.mxu0 0.0
    %517 = vmatprep.subr.mxu0 0.0
    %518 = vmatpush1.xpose.msra.mxu0 0.0
    %519 = vmatprep.subr.mxu0 0.0
    %520 = vmatpush1.xpose.msra.mxu0 0.0
    %521 = vmatprep.subr.mxu0 0.0
    %522 = vmatpush1.xpose.msra.mxu0 0.0
    %523 = vmatprep.subr.mxu0 0.0
    %524 = vmatpush1.xpose.msra.mxu0 0.0
    %525 = vmatprep.subr.mxu0 0.0
    %526 = vmatpush1.xpose.msra.mxu0 0.0
    %527 = vmatprep.subr.mxu0 0.0
    %528 = vmatpush1.xpose.msra.mxu0 0.0
    %529 = vmatprep.subr.mxu0 0.0
    %530 = vmatpush1.xpose.msra.mxu0 0.0
    %531 = vmatprep.subr.mxu0 0.0
    %532 = vmatpush1.xpose.msra.mxu0 0.0
    %533 = vmatprep.subr.mxu0 0.0
    %534 = vmatpush1.xpose.msra.mxu0 0.0
    %535 = vmatprep.subr.mxu0 0.0
    %536 = vmatpush1.xpose.msra.mxu0 0.0
    %537 = vmatprep.subr.mxu0 0.0
    %538 = vmatpush1.xpose.msra.mxu0 0.0
    %539 = vmatprep.subr.mxu0 0.0
    %540 = vmatpush1.xpose.msra.mxu0 0.0
    %541 = vmatprep.subr.mxu0 0.0
    %542 = vmatpush1.xpose.msra.mxu0 0.0
    %543 = vmatprep.subr.mxu0 0.0
    %544 = vmatpush1.xpose.msra.mxu0 0.0
    %545 = vmatprep.subr.mxu0 0.0
    %546 = vmatpush1.xpose.msra.mxu0 0.0
    %547 = vmatprep.subr.mxu0 0.0
    %548 = vmatpush1.xpose.msra.mxu0 0.0
    %549 = vmatprep.subr.mxu0 0.0
    %550 = vmatpush1.xpose.msra.mxu0 0.0
    %551 = vmatprep.subr.mxu0 0.0
    %552 = vmatpush1.xpose.msra.mxu0 0.0
    %553 = vmatprep.subr.mxu0 0.0
    %554 = vmatpush1.xpose.msra.mxu0 0.0
    %555 = vmatprep.subr.mxu0 0.0
    %556 = vmatpush1.xpose.msra.mxu0 0.0
    %557 = vmatprep.mubr.f32.mxu0 0.0
    %558 = vmatmul.mubr.f32.gmra.mrb[0].mxu0 %v484
    %v559 = vpop.f32.mrb[0].mxu0
    %v560 = vadd.f32 %v209, %v559
    %v561 = vpop.f32.mrb[0].mxu0
    %562 = vmatprep.mubr.f32.mxu0 0.0
    %563 = vmatmul.mubr.f32.gmra.mrb[0].mxu0 %v487
    %v564 = vpop.f32.mrb[0].mxu0
    %v565 = vadd.f32 %v210, %v564
    %v566 = vpop.f32.mrb[0].mxu0
    %567 = vdwg.mxu0
    %vm568 = vcmask 130048
    %v569 = vsel %vm568, %v293, -inf
    %570 = vmax.xlane.f32.xlu0 %v569
    %v571 = vpop.xlane.xlu0 %570
    %v572 = vsel %vm568, %v298, -inf
    %573 = vmax.xlane.f32.xlu0 %v572
    %v574 = vpop.xlane.xlu0 %573
    %v575 = vsel %vm568, %v382, -inf
    %576 = vmax.xlane.f32.xlu0 %v575
    %v577 = vpop.xlane.xlu0 %576
    %v578 = vsel %vm568, %v387, -inf
    %579 = vmax.xlane.f32.xlu0 %v578
    %v580 = vpop.xlane.xlu0 %579
    %v581 = vsel %vm568, %v471, -inf
    %582 = vmax.xlane.f32.xlu0 %v581
    %v583 = vpop.xlane.xlu0 %582
    %v584 = vsel %vm568, %v476, -inf
    %585 = vmax.xlane.f32.xlu0 %v584
    %v586 = vpop.xlane.xlu0 %585
    %v587 = vsel %vm568, %v560, -inf
    %588 = vmax.xlane.f32.xlu0 %v587
    %v589 = vpop.xlane.xlu0 %588
    %v590 = vsel %vm568, %v565, -inf
    %591 = vmax.xlane.f32.xlu0 %v590
    %v592 = vpop.xlane.xlu0 %591
    %v593 = vsub.f32 %v293, %v571
    %v594 = vsub.f32 %v298, %v574
    %v595 = vsub.f32 %v382, %v577
    %v596 = vsub.f32 %v387, %v580
    %v597 = vsub.f32 %v471, %v583
    %v598 = vsub.f32 %v476, %v586
    %v599 = vsub.f32 %v560, %v589
    %v600 = vsub.f32 %v565, %v592
    %v601 = vmul.f32 %v593, 1.442695
    %v602 = vpow.pop %v601
    %v603 = vmul.f32 %v594, 1.442695
    %v604 = vpow.pop %v603
    %v605 = vmul.f32 %v595, 1.442695
    %v606 = vpow.pop %v605
    %v607 = vmul.f32 %v596, 1.442695
    %v608 = vpow.pop %v607
    %v609 = vmul.f32 %v597, 1.442695
    %v610 = vpow.pop %v609
    %v611 = vmul.f32 %v598, 1.442695
    %v612 = vpow.pop %v611
    %v613 = vmul.f32 %v599, 1.442695
    %v614 = vpow.pop %v613
    %v615 = vmul.f32 %v600, 1.442695
    %v616 = vpow.pop %v615
    %v617 = vsel %vm568, %v602, 0.0
    %618 = vadd.xlane.f32.xlu0 %v617
    %v619 = vpop.xlane.xlu0 %618
    %v620 = vsel %vm568, %v604, 0.0
    %621 = vadd.xlane.f32.xlu0 %v620
    %v622 = vpop.xlane.xlu0 %621
    %v623 = vsel %vm568, %v606, 0.0
    %624 = vadd.xlane.f32.xlu0 %v623
    %v625 = vpop.xlane.xlu0 %624
    %v626 = vsel %vm568, %v608, 0.0
    %627 = vadd.xlane.f32.xlu0 %v626
    %v628 = vpop.xlane.xlu0 %627
    %v629 = vsel %vm568, %v610, 0.0
    %630 = vadd.xlane.f32.xlu0 %v629
    %v631 = vpop.xlane.xlu0 %630
    %v632 = vsel %vm568, %v612, 0.0
    %633 = vadd.xlane.f32.xlu0 %v632
    %v634 = vpop.xlane.xlu0 %633
    %v635 = vsel %vm568, %v614, 0.0
    %636 = vadd.xlane.f32.xlu0 %v635
    %v637 = vpop.xlane.xlu0 %636
    %v638 = vsel %vm568, %v616, 0.0
    %639 = vadd.xlane.f32.xlu0 %v638
    %v640 = vpop.xlane.xlu0 %639
    %v641 = vrcp.pop %v619
    %v642 = vrcp.pop %v622
    %v643 = vrcp.pop %v625
    %v644 = vrcp.pop %v628
    %v645 = vrcp.pop %v631
    %v646 = vrcp.pop %v634
    %v647 = vrcp.pop %v637
    %v648 = vrcp.pop %v640
    %v649 = vmul.f32 %v602, %v641
    %v650 = vmul.f32 %v604, %v642
    %v651 = vmul.f32 %v606, %v643
    %v652 = vmul.f32 %v608, %v644
    %v653 = vmul.f32 %v610, %v645
    %v654 = vmul.f32 %v612, %v646
    %v655 = vmul.f32 %v614, %v647
    %v656 = vmul.f32 %v616, %v648
    %657 = vrot.lane.b32.xlu0 %v130, 64
    %v658 = vpop.permute.xlu0 %657
    %659 = vrot.lane.b32.xlu0 %v135, 64
    %v660 = vpop.permute.xlu0 %659
    %v664 = vsel %vm568, %v649, 0
    %v667 = vsel %vm568, %v650, 0
    %669 = vmatprep.subr.mxu0 0.0
    %670 = vmatpush1.msra.mxu0 %v658
    %671 = vmatprep.subr.mxu0 0.0
    %672 = vmatpush1.msra.mxu0 %v660
    %673 = vmatprep.subr.mxu0 0.0
    %674 = vmatpush1.msra.mxu0 0.0
    %675 = vmatprep.subr.mxu0 0.0
    %676 = vmatpush1.msra.mxu0 0.0
    %677 = vmatprep.subr.mxu0 0.0
    %678 = vmatpush1.msra.mxu0 0.0
    %679 = vmatprep.subr.mxu0 0.0
    %680 = vmatpush1.msra.mxu0 0.0
    %681 = vmatprep.subr.mxu0 0.0
    %682 = vmatpush1.msra.mxu0 0.0
    %683 = vmatprep.subr.mxu0 0.0
    %684 = vmatpush1.msra.mxu0 0.0
    %685 = vmatprep.subr.mxu0 0.0
    %686 = vmatpush1.msra.mxu0 0.0
    %687 = vmatprep.subr.mxu0 0.0
    %688 = vmatpush1.msra.mxu0 0.0
    %689 = vmatprep.subr.mxu0 0.0
    %690 = vmatpush1.msra.mxu0 0.0
    %691 = vmatprep.subr.mxu0 0.0
    %692 = vmatpush1.msra.mxu0 0.0
    %693 = vmatprep.subr.mxu0 0.0
    %694 = vmatpush1.msra.mxu0 0.0
    %695 = vmatprep.subr.mxu0 0.0
    %696 = vmatpush1.msra.mxu0 0.0
    %697 = vmatprep.subr.mxu0 0.0
    %698 = vmatpush1.msra.mxu0 0.0
    %699 = vmatprep.subr.mxu0 0.0
    %700 = vmatpush1.msra.mxu0 0.0
    %701 = vmatprep.subr.mxu0 0.0
    %702 = vmatpush1.msra.mxu0 0.0
    %703 = vmatprep.subr.mxu0 0.0
    %704 = vmatpush1.msra.mxu0 0.0
    %705 = vmatprep.subr.mxu0 0.0
    %706 = vmatpush1.msra.mxu0 0.0
    %707 = vmatprep.subr.mxu0 0.0
    %708 = vmatpush1.msra.mxu0 0.0
    %709 = vmatprep.subr.mxu0 0.0
    %710 = vmatpush1.msra.mxu0 0.0
    %711 = vmatprep.subr.mxu0 0.0
    %712 = vmatpush1.msra.mxu0 0.0
    %713 = vmatprep.subr.mxu0 0.0
    %714 = vmatpush1.msra.mxu0 0.0
    %715 = vmatprep.subr.mxu0 0.0
    %716 = vmatpush1.msra.mxu0 0.0
    %717 = vmatprep.subr.mxu0 0.0
    %718 = vmatpush1.msra.mxu0 0.0
    %719 = vmatprep.subr.mxu0 0.0
    %720 = vmatpush1.msra.mxu0 0.0
    %721 = vmatprep.subr.mxu0 0.0
    %722 = vmatpush1.msra.mxu0 0.0
    %723 = vmatprep.subr.mxu0 0.0
    %724 = vmatpush1.msra.mxu0 0.0
    %725 = vmatprep.subr.mxu0 0.0
    %726 = vmatpush1.msra.mxu0 0.0
    %727 = vmatprep.subr.mxu0 0.0
    %728 = vmatpush1.msra.mxu0 0.0
    %729 = vmatprep.subr.mxu0 0.0
    %730 = vmatpush1.msra.mxu0 0.0
    %731 = vmatprep.subr.mxu0 0.0
    %732 = vmatpush1.msra.mxu0 0.0
    %733 = vmatprep.mubr.f32.mxu0 0.0
    %734 = vmatmul.mubr.f32.gmra.mrb[0].mxu0 %v664
    %v735 = vpop.f32.mrb[0].mxu0
    %v736 = vadd.f32 0.0, %v735
    %v737 = vpop.f32.mrb[0].mxu0
    %738 = vmatprep.mubr.f32.mxu0 0.0
    %739 = vmatmul.mubr.f32.gmra.mrb[0].mxu0 %v667
    %v740 = vpop.f32.mrb[0].mxu0
    %v741 = vadd.f32 0.0, %v740
    %v742 = vpop.f32.mrb[0].mxu0
    %743 = vdwg.mxu0
    %744 = vrot.lane.b32.xlu0 %v141, 64
    %v745 = vpop.permute.xlu0 %744
    %746 = vrot.lane.b32.xlu0 %v143, 64
    %v747 = vpop.permute.xlu0 %746
    %v751 = vsel %vm568, %v651, 0
    %v754 = vsel %vm568, %v652, 0
    %756 = vmatprep.subr.mxu0 0.0
    %757 = vmatpush1.msra.mxu0 %v745
    %758 = vmatprep.subr.mxu0 0.0
    %759 = vmatpush1.msra.mxu0 %v747
    %760 = vmatprep.subr.mxu0 0.0
    %761 = vmatpush1.msra.mxu0 0.0
    %762 = vmatprep.subr.mxu0 0.0
    %763 = vmatpush1.msra.mxu0 0.0
    %764 = vmatprep.subr.mxu0 0.0
    %765 = vmatpush1.msra.mxu0 0.0
    %766 = vmatprep.subr.mxu0 0.0
    %767 = vmatpush1.msra.mxu0 0.0
    %768 = vmatprep.subr.mxu0 0.0
    %769 = vmatpush1.msra.mxu0 0.0
    %770 = vmatprep.subr.mxu0 0.0
    %771 = vmatpush1.msra.mxu0 0.0
    %772 = vmatprep.subr.mxu0 0.0
    %773 = vmatpush1.msra.mxu0 0.0
    %774 = vmatprep.subr.mxu0 0.0
    %775 = vmatpush1.msra.mxu0 0.0
    %776 = vmatprep.subr.mxu0 0.0
    %777 = vmatpush1.msra.mxu0 0.0
    %778 = vmatprep.subr.mxu0 0.0
    %779 = vmatpush1.msra.mxu0 0.0
    %780 = vmatprep.subr.mxu0 0.0
    %781 = vmatpush1.msra.mxu0 0.0
    %782 = vmatprep.subr.mxu0 0.0
    %783 = vmatpush1.msra.mxu0 0.0
    %784 = vmatprep.subr.mxu0 0.0
    %785 = vmatpush1.msra.mxu0 0.0
    %786 = vmatprep.subr.mxu0 0.0
    %787 = vmatpush1.msra.mxu0 0.0
    %788 = vmatprep.subr.mxu0 0.0
    %789 = vmatpush1.msra.mxu0 0.0
    %790 = vmatprep.subr.mxu0 0.0
    %791 = vmatpush1.msra.mxu0 0.0
    %792 = vmatprep.subr.mxu0 0.0
    %793 = vmatpush1.msra.mxu0 0.0
    %794 = vmatprep.subr.mxu0 0.0
    %795 = vmatpush1.msra.mxu0 0.0
    %796 = vmatprep.subr.mxu0 0.0
    %797 = vmatpush1.msra.mxu0 0.0
    %798 = vmatprep.subr.mxu0 0.0
    %799 = vmatpush1.msra.mxu0 0.0
    %800 = vmatprep.subr.mxu0 0.0
    %801 = vmatpush1.msra.mxu0 0.0
    %802 = vmatprep.subr.mxu0 0.0
    %803 = vmatpush1.msra.mxu0 0.0
    %804 = vmatprep.subr.mxu0 0.0
    %805 = vmatpush1.msra.mxu0 0.0
    %806 = vmatprep.subr.mxu0 0.0
    %807 = vmatpush1.msra.mxu0 0.0
    %808 = vmatprep.subr.mxu0 0.0
    %809 = vmatpush1.msra.mxu0 0.0
    %810 = vmatprep.subr.mxu0 0.0
    %811 = vmatpush1.msra.mxu0 0.0
    %812 = vmatprep.subr.mxu0 0.0
    %813 = vmatpush1.msra.mxu0 0.0
    %814 = vmatprep.subr.mxu0 0.0
    %815 = vmatpush1.msra.mxu0 0.0
    %816 = vmatprep.subr.mxu0 0.0
    %817 = vmatpush1.msra.mxu0 0.0
    %818 = vmatprep.subr.mxu0 0.0
    %819 = vmatpush1.msra.mxu0 0.0
    %820 = vmatprep.mubr.f32.mxu0 0.0
    %821 = vmatmul.mubr.f32.gmra.mrb[0].mxu0 %v751
    %v822 = vpop.f32.mrb[0].mxu0
    %v823 = vadd.f32 0.0, %v822
    %v824 = vpop.f32.mrb[0].mxu0
    %825 = vmatprep.mubr.f32.mxu0 0.0
    %826 = vmatmul.mubr.f32.gmra.mrb[0].mxu0 %v754
    %v827 = vpop.f32.mrb[0].mxu0
    %v828 = vadd.f32 0.0, %v827
    %v829 = vpop.f32.mrb[0].mxu0
    %830 = vdwg.mxu0
    %831 = vrot.lane.b32.xlu0 %v147, 64
    %v832 = vpop.permute.xlu0 %831
    %833 = vrot.lane.b32.xlu0 %v149, 64
    %v834 = vpop.permute.xlu0 %833
    %v838 = vsel %vm568, %v653, 0
    %v841 = vsel %vm568, %v654, 0
    %843 = vmatprep.subr.mxu0 0.0
    %844 = vmatpush1.msra.mxu0 %v832
    %845 = vmatprep.subr.mxu0 0.0
    %846 = vmatpush1.msra.mxu0 %v834
    %847 = vmatprep.subr.mxu0 0.0
    %848 = vmatpush1.msra.mxu0 0.0
    %849 = vmatprep.subr.mxu0 0.0
    %850 = vmatpush1.msra.mxu0 0.0
    %851 = vmatprep.subr.mxu0 0.0
    %852 = vmatpush1.msra.mxu0 0.0
    %853 = vmatprep.subr.mxu0 0.0
    %854 = vmatpush1.msra.mxu0 0.0
    %855 = vmatprep.subr.mxu0 0.0
    %856 = vmatpush1.msra.mxu0 0.0
    %857 = vmatprep.subr.mxu0 0.0
    %858 = vmatpush1.msra.mxu0 0.0
    %859 = vmatprep.subr.mxu0 0.0
    %860 = vmatpush1.msra.mxu0 0.0
    %861 = vmatprep.subr.mxu0 0.0
    %862 = vmatpush1.msra.mxu0 0.0
    %863 = vmatprep.subr.mxu0 0.0
    %864 = vmatpush1.msra.mxu0 0.0
    %865 = vmatprep.subr.mxu0 0.0
    %866 = vmatpush1.msra.mxu0 0.0
    %867 = vmatprep.subr.mxu0 0.0
    %868 = vmatpush1.msra.mxu0 0.0
    %869 = vmatprep.subr.mxu0 0.0
    %870 = vmatpush1.msra.mxu0 0.0
    %871 = vmatprep.subr.mxu0 0.0
    %872 = vmatpush1.msra.mxu0 0.0
    %873 = vmatprep.subr.mxu0 0.0
    %874 = vmatpush1.msra.mxu0 0.0
    %875 = vmatprep.subr.mxu0 0.0
    %876 = vmatpush1.msra.mxu0 0.0
    %877 = vmatprep.subr.mxu0 0.0
    %878 = vmatpush1.msra.mxu0 0.0
    %879 = vmatprep.subr.mxu0 0.0
    %880 = vmatpush1.msra.mxu0 0.0
    %881 = vmatprep.subr.mxu0 0.0
    %882 = vmatpush1.msra.mxu0 0.0
    %883 = vmatprep.subr.mxu0 0.0
    %884 = vmatpush1.msra.mxu0 0.0
    %885 = vmatprep.subr.mxu0 0.0
    %886 = vmatpush1.msra.mxu0 0.0
    %887 = vmatprep.subr.mxu0 0.0
    %888 = vmatpush1.msra.mxu0 0.0
    %889 = vmatprep.subr.mxu0 0.0
    %890 = vmatpush1.msra.mxu0 0.0
    %891 = vmatprep.subr.mxu0 0.0
    %892 = vmatpush1.msra.mxu0 0.0
    %893 = vmatprep.subr.mxu0 0.0
    %894 = vmatpush1.msra.mxu0 0.0
    %895 = vmatprep.subr.mxu0 0.0
    %896 = vmatpush1.msra.mxu0 0.0
    %897 = vmatprep.subr.mxu0 0.0
    %898 = vmatpush1.msra.mxu0 0.0
    %899 = vmatprep.subr.mxu0 0.0
    %900 = vmatpush1.msra.mxu0 0.0
    %901 = vmatprep.subr.mxu0 0.0
    %902 = vmatpush1.msra.mxu0 0.0
    %903 = vmatprep.subr.mxu0 0.0
    %904 = vmatpush1.msra.mxu0 0.0
    %905 = vmatprep.subr.mxu0 0.0
    %906 = vmatpush1.msra.mxu0 0.0
    %907 = vmatprep.mubr.f32.mxu0 0.0
    %908 = vmatmul.mubr.f32.gmra.mrb[0].mxu0 %v838
    %v909 = vpop.f32.mrb[0].mxu0
    %v910 = vadd.f32 0.0, %v909
    %v911 = vpop.f32.mrb[0].mxu0
    %912 = vmatprep.mubr.f32.mxu0 0.0
    %913 = vmatmul.mubr.f32.gmra.mrb[0].mxu0 %v841
    %v914 = vpop.f32.mrb[0].mxu0
    %v915 = vadd.f32 0.0, %v914
    %v916 = vpop.f32.mrb[0].mxu0
    %917 = vdwg.mxu0
    %918 = vrot.lane.b32.xlu0 %v153, 64
    %v919 = vpop.permute.xlu0 %918
    %920 = vrot.lane.b32.xlu0 %v155, 64
    %v921 = vpop.permute.xlu0 %920
    %v925 = vsel %vm568, %v655, 0
    %v928 = vsel %vm568, %v656, 0
    %930 = vmatprep.subr.mxu0 0.0
    %931 = vmatpush1.msra.mxu0 %v919
    %932 = vmatprep.subr.mxu0 0.0
    %933 = vmatpush1.msra.mxu0 %v921
    %934 = vmatprep.subr.mxu0 0.0
    %935 = vmatpush1.msra.mxu0 0.0
    %936 = vmatprep.subr.mxu0 0.0
    %937 = vmatpush1.msra.mxu0 0.0
    %938 = vmatprep.subr.mxu0 0.0
    %939 = vmatpush1.msra.mxu0 0.0
    %940 = vmatprep.subr.mxu0 0.0
    %941 = vmatpush1.msra.mxu0 0.0
    %942 = vmatprep.subr.mxu0 0.0
    %943 = vmatpush1.msra.mxu0 0.0
    %944 = vmatprep.subr.mxu0 0.0
    %945 = vmatpush1.msra.mxu0 0.0
    %946 = vmatprep.subr.mxu0 0.0
    %947 = vmatpush1.msra.mxu0 0.0
    %948 = vmatprep.subr.mxu0 0.0
    %949 = vmatpush1.msra.mxu0 0.0
    %950 = vmatprep.subr.mxu0 0.0
    %951 = vmatpush1.msra.mxu0 0.0
    %952 = vmatprep.subr.mxu0 0.0
    %953 = vmatpush1.msra.mxu0 0.0
    %954 = vmatprep.subr.mxu0 0.0
    %955 = vmatpush1.msra.mxu0 0.0
    %956 = vmatprep.subr.mxu0 0.0
    %957 = vmatpush1.msra.mxu0 0.0
    %958 = vmatprep.subr.mxu0 0.0
    %959 = vmatpush1.msra.mxu0 0.0
    %960 = vmatprep.subr.mxu0 0.0
    %961 = vmatpush1.msra.mxu0 0.0
    %962 = vmatprep.subr.mxu0 0.0
    %963 = vmatpush1.msra.mxu0 0.0
    %964 = vmatprep.subr.mxu0 0.0
    %965 = vmatpush1.msra.mxu0 0.0
    %966 = vmatprep.subr.mxu0 0.0
    %967 = vmatpush1.msra.mxu0 0.0
    %968 = vmatprep.subr.mxu0 0.0
    %969 = vmatpush1.msra.mxu0 0.0
    %970 = vmatprep.subr.mxu0 0.0
    %971 = vmatpush1.msra.mxu0 0.0
    %972 = vmatprep.subr.mxu0 0.0
    %973 = vmatpush1.msra.mxu0 0.0
    %974 = vmatprep.subr.mxu0 0.0
    %975 = vmatpush1.msra.mxu0 0.0
    %976 = vmatprep.subr.mxu0 0.0
    %977 = vmatpush1.msra.mxu0 0.0
    %978 = vmatprep.subr.mxu0 0.0
    %979 = vmatpush1.msra.mxu0 0.0
    %980 = vmatprep.subr.mxu0 0.0
    %981 = vmatpush1.msra.mxu0 0.0
    %982 = vmatprep.subr.mxu0 0.0
    %983 = vmatpush1.msra.mxu0 0.0
    %984 = vmatprep.subr.mxu0 0.0
    %985 = vmatpush1.msra.mxu0 0.0
    %986 = vmatprep.subr.mxu0 0.0
    %987 = vmatpush1.msra.mxu0 0.0
    %988 = vmatprep.subr.mxu0 0.0
    %989 = vmatpush1.msra.mxu0 0.0
    %990 = vmatprep.subr.mxu0 0.0
    %991 = vmatpush1.msra.mxu0 0.0
    %992 = vmatprep.subr.mxu0 0.0
    %993 = vmatpush1.msra.mxu0 0.0
    %994 = vmatprep.mubr.f32.mxu0 0.0
    %995 = vmatmul.mubr.f32.gmra.mrb[0].mxu0 %v925
    %v996 = vpop.f32.mrb[0].mxu0
    %v997 = vadd.f32 0.0, %v996
    %v998 = vpop.f32.mrb[0].mxu0
    %999 = vmatprep.mubr.f32.mxu0 0.0
    %1000 = vmatmul.mubr.f32.gmra.mrb[0].mxu0 %v928
    %v1001 = vpop.f32.mrb[0].mxu0
    %v1002 = vadd.f32 0.0, %v1001
    %v1003 = vpop.f32.mrb[0].mxu0
    %1004 = vdwg.mxu0
    %v1005 = vld [vmem:[%s2] sm:$0xff]
    %v1006 = vld [vmem:[%s2 + $0x8] sm:$0xff]
    %v1007 = vld [vmem:[%s2 + $0x10] sm:$0xff]
    %v1008 = vld [vmem:[%s2 + $0x18] sm:$0xff]
    %v1010 = vsel %vm215, %v736, 0
    %v1013 = vsel %vm215, %v741, 0
    %1015 = vmatprep.subr.mxu0 0.0
    %1016 = vmatpush1.msra.mxu0 %v1005
    %1017 = vmatprep.subr.mxu0 0.0
    %1018 = vmatpush1.msra.mxu0 0.0
    %1019 = vmatprep.subr.mxu0 0.0
    %1020 = vmatpush1.msra.mxu0 0.0
    %1021 = vmatprep.subr.mxu0 0.0
    %1022 = vmatpush1.msra.mxu0 0.0
    %1023 = vmatprep.subr.mxu0 0.0
    %1024 = vmatpush1.msra.mxu0 0.0
    %1025 = vmatprep.subr.mxu0 0.0
    %1026 = vmatpush1.msra.mxu0 0.0
    %1027 = vmatprep.subr.mxu0 0.0
    %1028 = vmatpush1.msra.mxu0 0.0
    %1029 = vmatprep.subr.mxu0 0.0
    %1030 = vmatpush1.msra.mxu0 0.0
    %1031 = vmatprep.subr.mxu0 0.0
    %1032 = vmatpush1.msra.mxu0 0.0
    %1033 = vmatprep.subr.mxu0 0.0
    %1034 = vmatpush1.msra.mxu0 0.0
    %1035 = vmatprep.subr.mxu0 0.0
    %1036 = vmatpush1.msra.mxu0 0.0
    %1037 = vmatprep.subr.mxu0 0.0
    %1038 = vmatpush1.msra.mxu0 0.0
    %1039 = vmatprep.subr.mxu0 0.0
    %1040 = vmatpush1.msra.mxu0 0.0
    %1041 = vmatprep.subr.mxu0 0.0
    %1042 = vmatpush1.msra.mxu0 0.0
    %1043 = vmatprep.subr.mxu0 0.0
    %1044 = vmatpush1.msra.mxu0 0.0
    %1045 = vmatprep.subr.mxu0 0.0
    %1046 = vmatpush1.msra.mxu0 0.0
    %1047 = vmatprep.subr.mxu0 0.0
    %1048 = vmatpush1.msra.mxu0 0.0
    %1049 = vmatprep.subr.mxu0 0.0
    %1050 = vmatpush1.msra.mxu0 0.0
    %1051 = vmatprep.subr.mxu0 0.0
    %1052 = vmatpush1.msra.mxu0 0.0
    %1053 = vmatprep.subr.mxu0 0.0
    %1054 = vmatpush1.msra.mxu0 0.0
    %1055 = vmatprep.subr.mxu0 0.0
    %1056 = vmatpush1.msra.mxu0 0.0
    %1057 = vmatprep.subr.mxu0 0.0
    %1058 = vmatpush1.msra.mxu0 0.0
    %1059 = vmatprep.subr.mxu0 0.0
    %1060 = vmatpush1.msra.mxu0 0.0
    %1061 = vmatprep.subr.mxu0 0.0
    %1062 = vmatpush1.msra.mxu0 0.0
    %1063 = vmatprep.subr.mxu0 0.0
    %1064 = vmatpush1.msra.mxu0 0.0
    %1065 = vmatprep.subr.mxu0 0.0
    %1066 = vmatpush1.msra.mxu0 0.0
    %1067 = vmatprep.subr.mxu0 0.0
    %1068 = vmatpush1.msra.mxu0 0.0
    %1069 = vmatprep.subr.mxu0 0.0
    %1070 = vmatpush1.msra.mxu0 0.0
    %1071 = vmatprep.subr.mxu0 0.0
    %1072 = vmatpush1.msra.mxu0 0.0
    %1073 = vmatprep.subr.mxu0 0.0
    %1074 = vmatpush1.msra.mxu0 0.0
    %1075 = vmatprep.subr.mxu0 0.0
    %1076 = vmatpush1.msra.mxu0 0.0
    %1077 = vmatprep.subr.mxu0 0.0
    %1078 = vmatpush1.msra.mxu0 0.0
    %1079 = vmatprep.mubr.f32.mxu0 0.0
    %1080 = vmatmul.mubr.f32.gmra.mrb[0].mxu0 %v1010
    %v1081 = vpop.f32.mrb[0].mxu0
    %v1082 = vadd.f32 0.0, %v1081
    %v1083 = vpop.f32.mrb[0].mxu0
    %1084 = vmatprep.mubr.f32.mxu0 0.0
    %1085 = vmatmul.mubr.f32.gmra.mrb[0].mxu0 %v1013
    %v1086 = vpop.f32.mrb[0].mxu0
    %v1087 = vadd.f32 0.0, %v1086
    %v1088 = vpop.f32.mrb[0].mxu0
    %1089 = vdwg.mxu0
    %v1091 = vsel %vm215, %v823, 0
    %v1094 = vsel %vm215, %v828, 0
    %1096 = vmatprep.subr.mxu0 0.0
    %1097 = vmatpush1.msra.mxu0 %v1006
    %1098 = vmatprep.subr.mxu0 0.0
    %1099 = vmatpush1.msra.mxu0 0.0
    %1100 = vmatprep.subr.mxu0 0.0
    %1101 = vmatpush1.msra.mxu0 0.0
    %1102 = vmatprep.subr.mxu0 0.0
    %1103 = vmatpush1.msra.mxu0 0.0
    %1104 = vmatprep.subr.mxu0 0.0
    %1105 = vmatpush1.msra.mxu0 0.0
    %1106 = vmatprep.subr.mxu0 0.0
    %1107 = vmatpush1.msra.mxu0 0.0
    %1108 = vmatprep.subr.mxu0 0.0
    %1109 = vmatpush1.msra.mxu0 0.0
    %1110 = vmatprep.subr.mxu0 0.0
    %1111 = vmatpush1.msra.mxu0 0.0
    %1112 = vmatprep.subr.mxu0 0.0
    %1113 = vmatpush1.msra.mxu0 0.0
    %1114 = vmatprep.subr.mxu0 0.0
    %1115 = vmatpush1.msra.mxu0 0.0
    %1116 = vmatprep.subr.mxu0 0.0
    %1117 = vmatpush1.msra.mxu0 0.0
    %1118 = vmatprep.subr.mxu0 0.0
    %1119 = vmatpush1.msra.mxu0 0.0
    %1120 = vmatprep.subr.mxu0 0.0
    %1121 = vmatpush1.msra.mxu0 0.0
    %1122 = vmatprep.subr.mxu0 0.0
    %1123 = vmatpush1.msra.mxu0 0.0
    %1124 = vmatprep.subr.mxu0 0.0
    %1125 = vmatpush1.msra.mxu0 0.0
    %1126 = vmatprep.subr.mxu0 0.0
    %1127 = vmatpush1.msra.mxu0 0.0
    %1128 = vmatprep.subr.mxu0 0.0
    %1129 = vmatpush1.msra.mxu0 0.0
    %1130 = vmatprep.subr.mxu0 0.0
    %1131 = vmatpush1.msra.mxu0 0.0
    %1132 = vmatprep.subr.mxu0 0.0
    %1133 = vmatpush1.msra.mxu0 0.0
    %1134 = vmatprep.subr.mxu0 0.0
    %1135 = vmatpush1.msra.mxu0 0.0
    %1136 = vmatprep.subr.mxu0 0.0
    %1137 = vmatpush1.msra.mxu0 0.0
    %1138 = vmatprep.subr.mxu0 0.0
    %1139 = vmatpush1.msra.mxu0 0.0
    %1140 = vmatprep.subr.mxu0 0.0
    %1141 = vmatpush1.msra.mxu0 0.0
    %1142 = vmatprep.subr.mxu0 0.0
    %1143 = vmatpush1.msra.mxu0 0.0
    %1144 = vmatprep.subr.mxu0 0.0
    %1145 = vmatpush1.msra.mxu0 0.0
    %1146 = vmatprep.subr.mxu0 0.0
    %1147 = vmatpush1.msra.mxu0 0.0
    %1148 = vmatprep.subr.mxu0 0.0
    %1149 = vmatpush1.msra.mxu0 0.0
    %1150 = vmatprep.subr.mxu0 0.0
    %1151 = vmatpush1.msra.mxu0 0.0
    %1152 = vmatprep.subr.mxu0 0.0
    %1153 = vmatpush1.msra.mxu0 0.0
    %1154 = vmatprep.subr.mxu0 0.0
    %1155 = vmatpush1.msra.mxu0 0.0
    %1156 = vmatprep.subr.mxu0 0.0
    %1157 = vmatpush1.msra.mxu0 0.0
    %1158 = vmatprep.subr.mxu0 0.0
    %1159 = vmatpush1.msra.mxu0 0.0
    %1160 = vmatprep.mubr.f32.mxu0 0.0
    %1161 = vmatmul.mubr.f32.gmra.mrb[0].mxu0 %v1091
    %v1162 = vpop.f32.mrb[0].mxu0
    %v1163 = vadd.f32 0.0, %v1162
    %v1164 = vpop.f32.mrb[0].mxu0
    %1165 = vmatprep.mubr.f32.mxu0 0.0
    %1166 = vmatmul.mubr.f32.gmra.mrb[0].mxu0 %v1094
    %v1167 = vpop.f32.mrb[0].mxu0
    %v1168 = vadd.f32 0.0, %v1167
    %v1169 = vpop.f32.mrb[0].mxu0
    %1170 = vdwg.mxu0
    %v1172 = vsel %vm215, %v910, 0
    %v1175 = vsel %vm215, %v915, 0
    %1177 = vmatprep.subr.mxu0 0.0
    %1178 = vmatpush1.msra.mxu0 %v1007
    %1179 = vmatprep.subr.mxu0 0.0
    %1180 = vmatpush1.msra.mxu0 0.0
    %1181 = vmatprep.subr.mxu0 0.0
    %1182 = vmatpush1.msra.mxu0 0.0
    %1183 = vmatprep.subr.mxu0 0.0
    %1184 = vmatpush1.msra.mxu0 0.0
    %1185 = vmatprep.subr.mxu0 0.0
    %1186 = vmatpush1.msra.mxu0 0.0
    %1187 = vmatprep.subr.mxu0 0.0
    %1188 = vmatpush1.msra.mxu0 0.0
    %1189 = vmatprep.subr.mxu0 0.0
    %1190 = vmatpush1.msra.mxu0 0.0
    %1191 = vmatprep.subr.mxu0 0.0
    %1192 = vmatpush1.msra.mxu0 0.0
    %1193 = vmatprep.subr.mxu0 0.0
    %1194 = vmatpush1.msra.mxu0 0.0
    %1195 = vmatprep.subr.mxu0 0.0
    %1196 = vmatpush1.msra.mxu0 0.0
    %1197 = vmatprep.subr.mxu0 0.0
    %1198 = vmatpush1.msra.mxu0 0.0
    %1199 = vmatprep.subr.mxu0 0.0
    %1200 = vmatpush1.msra.mxu0 0.0
    %1201 = vmatprep.subr.mxu0 0.0
    %1202 = vmatpush1.msra.mxu0 0.0
    %1203 = vmatprep.subr.mxu0 0.0
    %1204 = vmatpush1.msra.mxu0 0.0
    %1205 = vmatprep.subr.mxu0 0.0
    %1206 = vmatpush1.msra.mxu0 0.0
    %1207 = vmatprep.subr.mxu0 0.0
    %1208 = vmatpush1.msra.mxu0 0.0
    %1209 = vmatprep.subr.mxu0 0.0
    %1210 = vmatpush1.msra.mxu0 0.0
    %1211 = vmatprep.subr.mxu0 0.0
    %1212 = vmatpush1.msra.mxu0 0.0
    %1213 = vmatprep.subr.mxu0 0.0
    %1214 = vmatpush1.msra.mxu0 0.0
    %1215 = vmatprep.subr.mxu0 0.0
    %1216 = vmatpush1.msra.mxu0 0.0
    %1217 = vmatprep.subr.mxu0 0.0
    %1218 = vmatpush1.msra.mxu0 0.0
    %1219 = vmatprep.subr.mxu0 0.0
    %1220 = vmatpush1.msra.mxu0 0.0
    %1221 = vmatprep.subr.mxu0 0.0
    %1222 = vmatpush1.msra.mxu0 0.0
    %1223 = vmatprep.subr.mxu0 0.0
    %1224 = vmatpush1.msra.mxu0 0.0
    %1225 = vmatprep.subr.mxu0 0.0
    %1226 = vmatpush1.msra.mxu0 0.0
    %1227 = vmatprep.subr.mxu0 0.0
    %1228 = vmatpush1.msra.mxu0 0.0
    %1229 = vmatprep.subr.mxu0 0.0
    %1230 = vmatpush1.msra.mxu0 0.0
    %1231 = vmatprep.subr.mxu0 0.0
    %1232 = vmatpush1.msra.mxu0 0.0
    %1233 = vmatprep.subr.mxu0 0.0
    %1234 = vmatpush1.msra.mxu0 0.0
    %1235 = vmatprep.subr.mxu0 0.0
    %1236 = vmatpush1.msra.mxu0 0.0
    %1237 = vmatprep.subr.mxu0 0.0
    %1238 = vmatpush1.msra.mxu0 0.0
    %1239 = vmatprep.subr.mxu0 0.0
    %1240 = vmatpush1.msra.mxu0 0.0
    %1241 = vmatprep.mubr.f32.mxu0 0.0
    %1242 = vmatmul.mubr.f32.gmra.mrb[0].mxu0 %v1172
    %v1243 = vpop.f32.mrb[0].mxu0
    %v1244 = vadd.f32 0.0, %v1243
    %v1245 = vpop.f32.mrb[0].mxu0
    %1246 = vmatprep.mubr.f32.mxu0 0.0
    %1247 = vmatmul.mubr.f32.gmra.mrb[0].mxu0 %v1175
    %v1248 = vpop.f32.mrb[0].mxu0
    %v1249 = vadd.f32 0.0, %v1248
    %v1250 = vpop.f32.mrb[0].mxu0
    %1251 = vdwg.mxu0
    %v1253 = vsel %vm215, %v997, 0
    %v1256 = vsel %vm215, %v1002, 0
    %1258 = vmatprep.subr.mxu0 0.0
    %1259 = vmatpush1.msra.mxu0 %v1008
    %1260 = vmatprep.subr.mxu0 0.0
    %1261 = vmatpush1.msra.mxu0 0.0
    %1262 = vmatprep.subr.mxu0 0.0
    %1263 = vmatpush1.msra.mxu0 0.0
    %1264 = vmatprep.subr.mxu0 0.0
    %1265 = vmatpush1.msra.mxu0 0.0
    %1266 = vmatprep.subr.mxu0 0.0
    %1267 = vmatpush1.msra.mxu0 0.0
    %1268 = vmatprep.subr.mxu0 0.0
    %1269 = vmatpush1.msra.mxu0 0.0
    %1270 = vmatprep.subr.mxu0 0.0
    %1271 = vmatpush1.msra.mxu0 0.0
    %1272 = vmatprep.subr.mxu0 0.0
    %1273 = vmatpush1.msra.mxu0 0.0
    %1274 = vmatprep.subr.mxu0 0.0
    %1275 = vmatpush1.msra.mxu0 0.0
    %1276 = vmatprep.subr.mxu0 0.0
    %1277 = vmatpush1.msra.mxu0 0.0
    %1278 = vmatprep.subr.mxu0 0.0
    %1279 = vmatpush1.msra.mxu0 0.0
    %1280 = vmatprep.subr.mxu0 0.0
    %1281 = vmatpush1.msra.mxu0 0.0
    %1282 = vmatprep.subr.mxu0 0.0
    %1283 = vmatpush1.msra.mxu0 0.0
    %1284 = vmatprep.subr.mxu0 0.0
    %1285 = vmatpush1.msra.mxu0 0.0
    %1286 = vmatprep.subr.mxu0 0.0
    %1287 = vmatpush1.msra.mxu0 0.0
    %1288 = vmatprep.subr.mxu0 0.0
    %1289 = vmatpush1.msra.mxu0 0.0
    %1290 = vmatprep.subr.mxu0 0.0
    %1291 = vmatpush1.msra.mxu0 0.0
    %1292 = vmatprep.subr.mxu0 0.0
    %1293 = vmatpush1.msra.mxu0 0.0
    %1294 = vmatprep.subr.mxu0 0.0
    %1295 = vmatpush1.msra.mxu0 0.0
    %1296 = vmatprep.subr.mxu0 0.0
    %1297 = vmatpush1.msra.mxu0 0.0
    %1298 = vmatprep.subr.mxu0 0.0
    %1299 = vmatpush1.msra.mxu0 0.0
    %1300 = vmatprep.subr.mxu0 0.0
    %1301 = vmatpush1.msra.mxu0 0.0
    %1302 = vmatprep.subr.mxu0 0.0
    %1303 = vmatpush1.msra.mxu0 0.0
    %1304 = vmatprep.subr.mxu0 0.0
    %1305 = vmatpush1.msra.mxu0 0.0
    %1306 = vmatprep.subr.mxu0 0.0
    %1307 = vmatpush1.msra.mxu0 0.0
    %1308 = vmatprep.subr.mxu0 0.0
    %1309 = vmatpush1.msra.mxu0 0.0
    %1310 = vmatprep.subr.mxu0 0.0
    %1311 = vmatpush1.msra.mxu0 0.0
    %1312 = vmatprep.subr.mxu0 0.0
    %1313 = vmatpush1.msra.mxu0 0.0
    %1314 = vmatprep.subr.mxu0 0.0
    %1315 = vmatpush1.msra.mxu0 0.0
    %1316 = vmatprep.subr.mxu0 0.0
    %1317 = vmatpush1.msra.mxu0 0.0
    %1318 = vmatprep.subr.mxu0 0.0
    %1319 = vmatpush1.msra.mxu0 0.0
    %1320 = vmatprep.subr.mxu0 0.0
    %1321 = vmatpush1.msra.mxu0 0.0
    %1322 = vmatprep.mubr.f32.mxu0 0.0
    %1323 = vmatmul.mubr.f32.gmra.mrb[0].mxu0 %v1253
    %v1324 = vpop.f32.mrb[0].mxu0
    %v1325 = vadd.f32 0.0, %v1324
    %v1326 = vpop.f32.mrb[0].mxu0
    %1327 = vmatprep.mubr.f32.mxu0 0.0
    %1328 = vmatmul.mubr.f32.gmra.mrb[0].mxu0 %v1256
    %v1329 = vpop.f32.mrb[0].mxu0
    %v1330 = vadd.f32 0.0, %v1329
    %v1331 = vpop.f32.mrb[0].mxu0
    %1332 = vdwg.mxu0
    %v1333 = vsel %vm56, %v1082, 0.0
    %v1334 = vsel %vm56, %v1163, 0.0
    %v1335 = vadd.f32 %v1333, %v1334
    %v1336 = vsel %vm56, %v1244, 0.0
    %v1337 = vadd.f32 %v1335, %v1336
    %v1338 = vsel %vm56, %v1325, 0.0
    %v1339 = vadd.f32 %v1337, %v1338
    %v1340 = vsel %vm56, %v1087, 0.0
    %v1341 = vsel %vm56, %v1168, 0.0
    %v1342 = vadd.f32 %v1340, %v1341
    %v1343 = vsel %vm56, %v1249, 0.0
    %v1344 = vadd.f32 %v1342, %v1343
    %v1345 = vsel %vm56, %v1330, 0.0
    %v1346 = vadd.f32 %v1344, %v1345
    %v1347 = vlaneseq
    %v1348 = vshrl.u32 %v1347, 7
    %v1349 = vsub.s32 0, %v1348
    %v1350 = vrot.slane %v42, %v1349
    %v1351 = vadd.f32 %v1339, %v1350
    %v1352 = vadd.f32 %v1346, %v1350
    %v1353 = vadd.f32 %v38, %v1351
    %v1354 = vadd.f32 %v39, %v1352
    %v1355 = vsel %vm56, %v1353, 0.0
    %1356 = vadd.xlane.f32.xlu0 %v1355
    %v1357 = vpop.xlane.xlu0 %1356
    %v1358 = vsel %vm56, %v1354, 0.0
    %1359 = vadd.xlane.f32.xlu0 %v1358
    %v1360 = vpop.xlane.xlu0 %1359
    %v1361 = vrcp.pop 32.0
    %v1362 = vmul.f32 %v1357, %v1361
    %v1363 = vmul.f32 %v1360, %v1361
    %v1364 = vsub.f32 %v1353, %v1362
    %v1365 = vsub.f32 %v1354, %v1363
    %v1366 = vmul.f32 %v1364, %v1364
    %v1367 = vmul.f32 %v1365, %v1365
    %v1368 = vsel %vm56, %v1366, 0.0
    %1369 = vadd.xlane.f32.xlu0 %v1368
    %v1370 = vpop.xlane.xlu0 %1369
    %v1371 = vsel %vm56, %v1367, 0.0
    %1372 = vadd.xlane.f32.xlu0 %v1371
    %v1373 = vpop.xlane.xlu0 %1372
    %v1374 = vmul.f32 %v1370, %v1361
    %v1375 = vmul.f32 %v1373, %v1361
    %v1376 = vadd.f32 %v1374, 1e-05
    %v1377 = vadd.f32 %v1375, 1e-05
    %v1378 = vrsqrt.pop %v1376
    %v1379 = vrsqrt.pop %v1377
    %v1380 = vmul.f32 %v1364, %v1378
    %v1381 = vmul.f32 %v1365, %v1379
    %v1382 = vlaneseq
    %v1383 = vshrl.u32 %v1382, 7
    %v1384 = vsub.s32 0, %v1383
    %v1385 = vrot.slane %v43, %v1384
    %v1386 = vmul.f32 %v1380, %v1385
    %v1387 = vmul.f32 %v1381, %v1385
    %v1388 = vlaneseq
    %v1389 = vshrl.u32 %v1388, 7
    %v1390 = vsub.s32 0, %v1389
    %v1391 = vrot.slane %v44, %v1390
    %v1392 = vadd.f32 %v1386, %v1391
    %v1393 = vadd.f32 %v1387, %v1391
    %v1394 = vld [vmem:[%s3] sm:$0xff]
    %v1395 = vld [vmem:[%s3 + $0x8] sm:$0xff]
    %v1396 = vld [vmem:[%s3 + $0x10] sm:$0xff]
    %v1397 = vld [vmem:[%s3 + $0x18] sm:$0xff]
    %v1398 = vlaneseq
    %v1399 = vshrl.u32 %v1398, 7
    %v1400 = vsub.s32 0, %v1399
    %v1401 = vrot.slane %v41, %v1400
    %v1403 = vsel %vm56, %v1392, 0
    %v1406 = vsel %vm56, %v1393, 0
    %1408 = vmatprep.subr.mxu0 0.0
    %1409 = vmatpush1.msra.mxu0 %v1394
    %1410 = vmatprep.subr.mxu0 0.0
    %1411 = vmatpush1.msra.mxu0 %v1395
    %1412 = vmatprep.subr.mxu0 0.0
    %1413 = vmatpush1.msra.mxu0 %v1396
    %1414 = vmatprep.subr.mxu0 0.0
    %1415 = vmatpush1.msra.mxu0 %v1397
    %1416 = vmatprep.subr.mxu0 0.0
    %1417 = vmatpush1.msra.mxu0 0.0
    %1418 = vmatprep.subr.mxu0 0.0
    %1419 = vmatpush1.msra.mxu0 0.0
    %1420 = vmatprep.subr.mxu0 0.0
    %1421 = vmatpush1.msra.mxu0 0.0
    %1422 = vmatprep.subr.mxu0 0.0
    %1423 = vmatpush1.msra.mxu0 0.0
    %1424 = vmatprep.subr.mxu0 0.0
    %1425 = vmatpush1.msra.mxu0 0.0
    %1426 = vmatprep.subr.mxu0 0.0
    %1427 = vmatpush1.msra.mxu0 0.0
    %1428 = vmatprep.subr.mxu0 0.0
    %1429 = vmatpush1.msra.mxu0 0.0
    %1430 = vmatprep.subr.mxu0 0.0
    %1431 = vmatpush1.msra.mxu0 0.0
    %1432 = vmatprep.subr.mxu0 0.0
    %1433 = vmatpush1.msra.mxu0 0.0
    %1434 = vmatprep.subr.mxu0 0.0
    %1435 = vmatpush1.msra.mxu0 0.0
    %1436 = vmatprep.subr.mxu0 0.0
    %1437 = vmatpush1.msra.mxu0 0.0
    %1438 = vmatprep.subr.mxu0 0.0
    %1439 = vmatpush1.msra.mxu0 0.0
    %1440 = vmatprep.subr.mxu0 0.0
    %1441 = vmatpush1.msra.mxu0 0.0
    %1442 = vmatprep.subr.mxu0 0.0
    %1443 = vmatpush1.msra.mxu0 0.0
    %1444 = vmatprep.subr.mxu0 0.0
    %1445 = vmatpush1.msra.mxu0 0.0
    %1446 = vmatprep.subr.mxu0 0.0
    %1447 = vmatpush1.msra.mxu0 0.0
    %1448 = vmatprep.subr.mxu0 0.0
    %1449 = vmatpush1.msra.mxu0 0.0
    %1450 = vmatprep.subr.mxu0 0.0
    %1451 = vmatpush1.msra.mxu0 0.0
    %1452 = vmatprep.subr.mxu0 0.0
    %1453 = vmatpush1.msra.mxu0 0.0
    %1454 = vmatprep.subr.mxu0 0.0
    %1455 = vmatpush1.msra.mxu0 0.0
    %1456 = vmatprep.subr.mxu0 0.0
    %1457 = vmatpush1.msra.mxu0 0.0
    %1458 = vmatprep.subr.mxu0 0.0
    %1459 = vmatpush1.msra.mxu0 0.0
    %1460 = vmatprep.subr.mxu0 0.0
    %1461 = vmatpush1.msra.mxu0 0.0
    %1462 = vmatprep.subr.mxu0 0.0
    %1463 = vmatpush1.msra.mxu0 0.0
    %1464 = vmatprep.subr.mxu0 0.0
    %1465 = vmatpush1.msra.mxu0 0.0
    %1466 = vmatprep.subr.mxu0 0.0
    %1467 = vmatpush1.msra.mxu0 0.0
    %1468 = vmatprep.subr.mxu0 0.0
    %1469 = vmatpush1.msra.mxu0 0.0
    %1470 = vmatprep.subr.mxu0 0.0
    %1471 = vmatpush1.msra.mxu0 0.0
    %1472 = vmatprep.mubr.f32.mxu0 0.0
    %1473 = vmatmul.mubr.f32.gmra.mrb[0].mxu0 %v1403
    %v1474 = vpop.f32.mrb[0].mxu0
    %v1475 = vadd.f32 %v1401, %v1474
    %v1476 = vpop.f32.mrb[0].mxu0
    %1477 = vmatprep.mubr.f32.mxu0 0.0
    %1478 = vmatmul.mubr.f32.gmra.mrb[0].mxu0 %v1406
    %v1479 = vpop.f32.mrb[0].mxu0
    %v1480 = vadd.f32 %v1401, %v1479
    %v1481 = vpop.f32.mrb[0].mxu0
    %1482 = vdwg.mxu0
    %v1483 = vmax.f32 %v1475, 0.0
    %v1484 = vmax.f32 %v1480, 0.0
    %v1485 = vld [vmem:[%s4] sm:$0xff]
    %v1486 = vld [vmem:[%s4 + $0x8] sm:$0xff]
    %v1487 = vld [vmem:[%s4 + $0x10] sm:$0xff]
    %v1488 = vld [vmem:[%s4 + $0x18] sm:$0xff]
    %v1489 = vld [vmem:[%s4 + $0x20] sm:$0xff]
    %v1490 = vld [vmem:[%s4 + $0x28] sm:$0xff]
    %v1491 = vld [vmem:[%s4 + $0x30] sm:$0xff]
    %v1492 = vld [vmem:[%s4 + $0x38] sm:$0xff]
    %v1493 = vlaneseq
    %v1494 = vshrl.u32 %v1493, 7
    %v1495 = vsub.s32 0, %v1494
    %v1496 = vrot.slane %v45, %v1495
    %vm1497 = vcmask 523264
    %v1499 = vsel %vm1497, %v1483, 0
    %v1502 = vsel %vm1497, %v1484, 0
    %1504 = vmatprep.subr.mxu0 0.0
    %1505 = vmatpush1.msra.mxu0 %v1485
    %1506 = vmatprep.subr.mxu0 0.0
    %1507 = vmatpush1.msra.mxu0 %v1486
    %1508 = vmatprep.subr.mxu0 0.0
    %1509 = vmatpush1.msra.mxu0 %v1487
    %1510 = vmatprep.subr.mxu0 0.0
    %1511 = vmatpush1.msra.mxu0 %v1488
    %1512 = vmatprep.subr.mxu0 0.0
    %1513 = vmatpush1.msra.mxu0 %v1489
    %1514 = vmatprep.subr.mxu0 0.0
    %1515 = vmatpush1.msra.mxu0 %v1490
    %1516 = vmatprep.subr.mxu0 0.0
    %1517 = vmatpush1.msra.mxu0 %v1491
    %1518 = vmatprep.subr.mxu0 0.0
    %1519 = vmatpush1.msra.mxu0 %v1492
    %1520 = vmatprep.subr.mxu0 0.0
    %1521 = vmatpush1.msra.mxu0 0.0
    %1522 = vmatprep.subr.mxu0 0.0
    %1523 = vmatpush1.msra.mxu0 0.0
    %1524 = vmatprep.subr.mxu0 0.0
    %1525 = vmatpush1.msra.mxu0 0.0
    %1526 = vmatprep.subr.mxu0 0.0
    %1527 = vmatpush1.msra.mxu0 0.0
    %1528 = vmatprep.subr.mxu0 0.0
    %1529 = vmatpush1.msra.mxu0 0.0
    %1530 = vmatprep.subr.mxu0 0.0
    %1531 = vmatpush1.msra.mxu0 0.0
    %1532 = vmatprep.subr.mxu0 0.0
    %1533 = vmatpush1.msra.mxu0 0.0
    %1534 = vmatprep.subr.mxu0 0.0
    %1535 = vmatpush1.msra.mxu0 0.0
    %1536 = vmatprep.subr.mxu0 0.0
    %1537 = vmatpush1.msra.mxu0 0.0
    %1538 = vmatprep.subr.mxu0 0.0
    %1539 = vmatpush1.msra.mxu0 0.0
    %1540 = vmatprep.subr.mxu0 0.0
    %1541 = vmatpush1.msra.mxu0 0.0
    %1542 = vmatprep.subr.mxu0 0.0
    %1543 = vmatpush1.msra.mxu0 0.0
    %1544 = vmatprep.subr.mxu0 0.0
    %1545 = vmatpush1.msra.mxu0 0.0
    %1546 = vmatprep.subr.mxu0 0.0
    %1547 = vmatpush1.msra.mxu0 0.0
    %1548 = vmatprep.subr.mxu0 0.0
    %1549 = vmatpush1.msra.mxu0 0.0
    %1550 = vmatprep.subr.mxu0 0.0
    %1551 = vmatpush1.msra.mxu0 0.0
    %1552 = vmatprep.subr.mxu0 0.0
    %1553 = vmatpush1.msra.mxu0 0.0
    %1554 = vmatprep.subr.mxu0 0.0
    %1555 = vmatpush1.msra.mxu0 0.0
    %1556 = vmatprep.subr.mxu0 0.0
    %1557 = vmatpush1.msra.mxu0 0.0
    %1558 = vmatprep.subr.mxu0 0.0
    %1559 = vmatpush1.msra.mxu0 0.0
    %1560 = vmatprep.subr.mxu0 0.0
    %1561 = vmatpush1.msra.mxu0 0.0
    %1562 = vmatprep.subr.mxu0 0.0
    %1563 = vmatpush1.msra.mxu0 0.0
    %1564 = vmatprep.subr.mxu0 0.0
    %1565 = vmatpush1.msra.mxu0 0.0
    %1566 = vmatprep.subr.mxu0 0.0
    %1567 = vmatpush1.msra.mxu0 0.0
    %1568 = vmatprep.mubr.f32.mxu0 0.0
    %1569 = vmatmul.mubr.f32.gmra.mrb[0].mxu0 %v1499
    %v1570 = vpop.f32.mrb[0].mxu0
    %v1571 = vadd.f32 %v1496, %v1570
    %v1572 = vpop.f32.mrb[0].mxu0
    %1573 = vmatprep.mubr.f32.mxu0 0.0
    %1574 = vmatmul.mubr.f32.gmra.mrb[0].mxu0 %v1502
    %v1575 = vpop.f32.mrb[0].mxu0
    %v1576 = vadd.f32 %v1496, %v1575
    %v1577 = vpop.f32.mrb[0].mxu0
    %1578 = vdwg.mxu0
    %v1579 = vadd.f32 %v1392, %v1571
    %v1580 = vadd.f32 %v1393, %v1576
    %v1581 = vsel %vm56, %v1579, 0.0
    %1582 = vadd.xlane.f32.xlu0 %v1581
    %v1583 = vpop.xlane.xlu0 %1582
    %v1584 = vsel %vm56, %v1580, 0.0
    %1585 = vadd.xlane.f32.xlu0 %v1584
    %v1586 = vpop.xlane.xlu0 %1585
    %v1587 = vmul.f32 %v1583, %v1361
    %v1588 = vmul.f32 %v1586, %v1361
    %v1589 = vsub.f32 %v1579, %v1587
    %v1590 = vsub.f32 %v1580, %v1588
    %v1591 = vmul.f32 %v1589, %v1589
    %v1592 = vmul.f32 %v1590, %v1590
    %v1593 = vsel %vm56, %v1591, 0.0
    %1594 = vadd.xlane.f32.xlu0 %v1593
    %v1595 = vpop.xlane.xlu0 %1594
    %v1596 = vsel %vm56, %v1592, 0.0
    %1597 = vadd.xlane.f32.xlu0 %v1596
    %v1598 = vpop.xlane.xlu0 %1597
    %v1599 = vmul.f32 %v1595, %v1361
    %v1600 = vmul.f32 %v1598, %v1361
    %v1601 = vadd.f32 %v1599, 1e-05
    %v1602 = vadd.f32 %v1600, 1e-05
    %v1603 = vrsqrt.pop %v1601
    %v1604 = vrsqrt.pop %v1602
    %v1605 = vmul.f32 %v1589, %v1603
    %v1606 = vmul.f32 %v1590, %v1604
    %v1607 = vlaneseq
    %v1608 = vshrl.u32 %v1607, 7
    %v1609 = vsub.s32 0, %v1608
    %v1610 = vrot.slane %v46, %v1609
    %v1611 = vmul.f32 %v1605, %v1610
    %v1612 = vmul.f32 %v1606, %v1610
    %v1613 = vlaneseq
    %v1614 = vshrl.u32 %v1613, 7
    %v1615 = vsub.s32 0, %v1614
    %v1616 = vrot.slane %v47, %v1615
    %v1617 = vadd.f32 %v1611, %v1616
    %v1618 = vadd.f32 %v1612, %v1616
    %1619 = vst.msk [vmem:[#allocation5] sm:$0xff] %vm56, %v1617
    %1620 = vst.msk [vmem:[#allocation5 + $0x8] sm:$0xff] %vm56, %v1618
    // Predicated region
    $region30: #{tpu_custom_call.1} parent=1 // pred_check
      _
    $region31: #{tpu_custom_call.1} parent=1 // pred_check_branch
      %1622 = sbr.rel (0) target = $region33
    $region32: #{tpu_custom_call.1} parent=1 // pred_region
      %s1624 = ssub.s32 256, 256
      %1625 = vsyncadd [#allocation4], %s1624
      %s1626 = sshll.u32 [#allocation5], 4
      %s1627 = int_to_ptr.vmem [resolvable:$true] %s1626
      %1632 = dma.vmem_to_hbm [thread:$0]  %s1627, 256, %s6, [#allocation4], 128, 128, 8
    $region33: #{tpu_custom_call.1} parent=1 // pred_fallthru
      _
    // Predicated region
    $region34: #{tpu_custom_call.1} parent=1 // pred_check
      _
    $region35: #{tpu_custom_call.1} parent=1 // pred_check_branch
      %1634 = sbr.rel (0) target = $region37
    $region36: #{tpu_custom_call.1} parent=1 // pred_region
      %1635 = dma.done [#allocation4], 256
    $region37: #{tpu_custom_call.1} parent=1 // pred_fallthru
      _
    %1636 = vsyncpa [#allocation3], 1
    %1637 = vsyncpa [#allocation4], 1

</llo_original>
